<compile_context>
chip_gen: v6e
topology: v6e:2x2x1
jax: 0.10.0
libtpu: 0.0.40
codegen_flags: <defaults>
</compile_context>

<pallas_src>
import jax
import jax.numpy as jnp
from jax import lax
from jax.experimental import pallas as pl
from jax.experimental.pallas import tpu as pltpu

_LN_EPS = 1e-5
_LANE = 128


def _round_up(n, m):
    return ((n + m - 1) // m) * m


# ----------------------------------------------------------------------------
# Fused kernel factory
# ----------------------------------------------------------------------------
def _make_fused_kernel(n_layers, real_dims, padded_dims, deterministic):
    """Fused MLP kernel.

    Ref order: x, packed_vecs, W_0 .. W_{L-1}, [noise], out
    packed_vecs rows: [b_0, gamma_0, beta_0, b_1, gamma_1, beta_1, ...,
                       b_last, logstd], each zero-padded to the lane width.
    """

    def kernel(*refs):
        x_ref = refs[0]
        vecs_ref = refs[1]
        w_refs = refs[2:2 + n_layers]
        if deterministic:
            noise_ref = None
            out_ref = refs[2 + n_layers]
        else:
            noise_ref = refs[2 + n_layers]
            out_ref = refs[3 + n_layers]

        vecs = vecs_ref[...]                          # (rows, lane_max) f32
        h = x_ref[...].astype(jnp.float32)            # (TILE_B, D0_pad)

        # Hidden layers: Linear -> ELU -> LayerNorm, all resident in VMEM.
        for i in range(n_layers - 1):
            d_real = real_dims[i + 1]
            d_pad = padded_dims[i + 1]
            w = w_refs[i][...]                        # (Din_pad, Dout_pad)
            y = jnp.dot(h.astype(w.dtype), w,
                        preferred_element_type=jnp.float32)
            y = y + vecs[3 * i:3 * i + 1, :d_pad]     # + b_i
            # ELU(alpha=1). min-clamp keeps the discarded branch finite.
            # TODO(synk): use jnp.expm1 once confirmed in the Mosaic lowering set.
            y = jnp.where(y > 0.0, y, jnp.exp(jnp.minimum(y, 0.0)) - 1.0)
            # LayerNorm over the REAL features only. Padded lanes of y are
            # exactly zero (padded W columns / b entries are zero, ELU(0)=0),
            # so the mean sum already only sees real features; the variance
            # uses a lane mask so padded lanes don't contribute (y - mean)^2.
            inv_n = 1.0 / float(d_real)
            mean = jnp.sum(y, axis=-1, keepdims=True) * inv_n
            centered = y - mean
            if d_real != d_pad:
                lane = lax.broadcasted_iota(jnp.int32, (1, d_pad), 1)
                centered = centered * (lane < d_real).astype(jnp.float32)
            var = jnp.sum(centered * centered, axis=-1, keepdims=True) * inv_n
            y_norm = centered * lax.rsqrt(var + _LN_EPS)
            gamma = vecs[3 * i + 1:3 * i + 2, :d_pad]
            beta = vecs[3 * i + 2:3 * i + 3, :d_pad]
            h = y_norm * gamma + beta                 # padded lanes stay 0

        # Final layer: Linear (identity activation) + optional rsample.
        d_pad = padded_dims[-1]
        rb = 3 * (n_layers - 1)
        w = w_refs[-1][...]
        mu = jnp.dot(h.astype(w.dtype), w, preferred_element_type=jnp.float32)
        mu = mu + vecs[rb:rb + 1, :d_pad]
        if deterministic:
            out_ref[...] = mu.astype(out_ref.dtype)
        else:
            logstd = vecs[rb + 1:rb + 2, :d_pad]
            out_ref[...] = (mu + jnp.exp(logstd) * noise_ref[...]
                            ).astype(out_ref.dtype)

    return kernel


# ----------------------------------------------------------------------------
# Parameter construction (matches nn.Linear / LayerNorm defaults) and packing
# ----------------------------------------------------------------------------
def init_actor_params(key, state_obs_dim, units, action_dim, logstd_init=-1.0):
    layer_dims = [state_obs_dim] + list(units) + [action_dim]
    params = {"linears": [], "layernorms": []}
    n_layers = len(layer_dims) - 1
    keys = jax.random.split(key, 2 * n_layers)
    for i in range(n_layers):
        din, dout = layer_dims[i], layer_dims[i + 1]
        bound = 1.0 / jnp.sqrt(jnp.float32(din))
        w = jax.random.uniform(keys[2 * i], (din, dout),
                               minval=-bound, maxval=bound, dtype=jnp.float32)
        b = jax.random.uniform(keys[2 * i + 1], (1, dout),
                               minval=-bound, maxval=bound, dtype=jnp.float32)
        params["linears"].append((w, b))
        if i < n_layers - 1:
            params["layernorms"].append((jnp.ones((1, dout), jnp.float32),
                                         jnp.zeros((1, dout), jnp.float32)))
    params["logstd"] = jnp.full((1, action_dim), logstd_init, jnp.float32)
    return params


def prepare_packed_params(params, matmul_dtype=jnp.float32):
    """Zero-pad weights to 128-lane multiples and pack small vectors."""
    linears = params["linears"]
    lns = params["layernorms"]
    logstd = params["logstd"]
    n_layers = len(linears)
    real_dims = [linears[0][0].shape[0]] + [w.shape[1] for w, _ in linears]
    padded_dims = [_round_up(d, _LANE) for d in real_dims]
    dmax = max(padded_dims[1:])

    w_padded = []
    rows = []
    for i, (w, b) in enumerate(linears):
        din, dout = w.shape
        wp = jnp.zeros((padded_dims[i], padded_dims[i + 1]), jnp.float32)
        wp = wp.at[:din, :dout].set(w)
        w_padded.append(wp.astype(matmul_dtype))
        rows.append(jnp.zeros((dmax,), jnp.float32).at[:dout].set(b.reshape(-1)))
        if i < n_layers - 1:
            g, be = lns[i]
            rows.append(jnp.zeros((dmax,), jnp.float32).at[:dout].set(g.reshape(-1)))
            rows.append(jnp.zeros((dmax,), jnp.float32).at[:dout].set(be.reshape(-1)))
    rows.append(jnp.zeros((dmax,), jnp.float32)
                .at[:real_dims[-1]].set(logstd.reshape(-1)))
    vecs = jnp.stack(rows, axis=0)
    r_pad = _round_up(vecs.shape[0], 8)
    if r_pad != vecs.shape[0]:
        vecs = jnp.pad(vecs, ((0, r_pad - vecs.shape[0]), (0, 0)))

    return {"w": tuple(w_padded), "vecs": vecs,
            "real_dims": tuple(real_dims), "padded_dims": tuple(padded_dims)}


# ----------------------------------------------------------------------------
# Forward-pass factory (mirrors ActorStochasticMLP.forward)
# ----------------------------------------------------------------------------
def make_actor_forward(packed, *, deterministic=False, tile_b=128):
    real_dims = packed["real_dims"]
    padded_dims = packed["padded_dims"]
    weights = packed["w"]
    vecs = packed["vecs"]
    n_layers = len(weights)
    kernel = _make_fused_kernel(n_layers, real_dims, padded_dims, deterministic)

    d0, dl = real_dims[0], real_dims[-1]
    d0p, dlp = padded_dims[0], padded_dims[-1]
    weight_specs = [pl.BlockSpec(w.shape, lambda i: (0, 0)) for w in weights]
    vecs_spec = pl.BlockSpec(vecs.shape, lambda i: (0, 0))
    cparams = pltpu.CompilerParams(
        dimension_semantics=("parallel",),        # v7x: shard batch over 2 TCs
        vmem_limit_bytes=32 * 1024 * 1024)        # headroom vs v7x 64 MiB VMEM

    def _call(x_padded, noise_padded):
        bp = x_padded.shape[0]
        in_specs = [pl.BlockSpec((tile_b, d0p), lambda i: (i, 0)),
                    vecs_spec] + weight_specs
        inputs = [x_padded, vecs, *weights]
        if not deterministic:
            in_specs.append(pl.BlockSpec((tile_b, dlp), lambda i: (i, 0)))
            inputs.append(noise_padded)
        return pl.pallas_call(
            kernel,
            out_shape=jax.ShapeDtypeStruct((bp, dlp), jnp.float32),
            grid=(bp // tile_b,),
            in_specs=in_specs,
            out_specs=pl.BlockSpec((tile_b, dlp), lambda i: (i, 0)),
            compiler_params=cparams,
        )(*inputs)

    if deterministic:
        @jax.jit
        def fwd(obs):
            b = obs.shape[0]
            bp = _round_up(max(b, tile_b), tile_b)
            x = jnp.zeros((bp, d0p), jnp.float32).at[:b, :d0].set(
                obs.astype(jnp.float32))
            return _call(x, None)[:b, :dl]
    else:
        @jax.jit
        def fwd(obs, noise):
            b = obs.shape[0]
            bp = _round_up(max(b, tile_b), tile_b)
            x = jnp.zeros((bp, d0p), jnp.float32).at[:b, :d0].set(
                obs.astype(jnp.float32))
            nz = jnp.zeros((bp, dlp), jnp.float32).at[:b, :dl].set(
                noise.astype(jnp.float32))
            return _call(x, nz)[:b, :dl]
    return fwd


# ----------------------------------------------------------------------------
# Pure-JAX reference for correctness checking
# ----------------------------------------------------------------------------
def actor_forward_ref(params, obs, noise=None, deterministic=False,
                      matmul_dtype=jnp.float32):
    h = obs.astype(jnp.float32)
    n_layers = len(params["linears"])
    for i in range(n_layers - 1):
        w, b = params["linears"][i]
        gamma, beta = params["layernorms"][i]
        y = jnp.dot(h.astype(matmul_dtype), w.astype(matmul_dtype),
                    preferred_element_type=jnp.float32) + b
        y = jnp.where(y > 0.0, y, jnp.exp(jnp.minimum(y, 0.0)) - 1.0)
        mean = jnp.mean(y, axis=-1, keepdims=True)
        var = jnp.mean((y - mean) ** 2, axis=-1, keepdims=True)
        h = (y - mean) / jnp.sqrt(var + _LN_EPS) * gamma + beta
    w, b = params["linears"][-1]
    mu = jnp.dot(h.astype(matmul_dtype), w.astype(matmul_dtype),
                 preferred_element_type=jnp.float32) + b
    if deterministic:
        return mu
    return mu + jnp.exp(params["logstd"]) * noise


# ----------------------------------------------------------------------------
if __name__ == "__main__":
    # Shapes consistent with the module: state_obs_dim=32, actor_mlp.units=[64,64],
    # action_dim=8, activation='elu', actor_logstd_init=-1.0. batch=200 exercises
    # the batch grid (2 tiles of 128) plus batch padding.
    batch = 200
    state_obs_dim = 32
    units = [64, 64]
    action_dim = 8
    tile_b = 128

    key = jax.random.PRNGKey(0)
    k_param, k_obs, k_noise = jax.random.split(key, 3)
    params = init_actor_params(k_param, state_obs_dim, units, action_dim,
                               logstd_init=-1.0)
    obs = jax.random.normal(k_obs, (batch, state_obs_dim), dtype=jnp.float32)
    noise = jax.random.normal(k_noise, (batch, action_dim), dtype=jnp.float32)

    # --- f32 path (exact semantics of the PyTorch module) ---
    packed_f32 = prepare_packed_params(params, matmul_dtype=jnp.float32)
    fwd_stoch = make_actor_forward(packed_f32, deterministic=False, tile_b=tile_b)
    fwd_det = make_actor_forward(packed_f32, deterministic=True, tile_b=tile_b)

    sample = jax.block_until_ready(fwd_stoch(obs, noise))   # Normal(mu,std).rsample()
    mu = jax.block_until_ready(fwd_det(obs))                # deterministic -> mu

    sample_ref = actor_forward_ref(params, obs, noise, deterministic=False)
    mu_ref = actor_forward_ref(params, obs, deterministic=True)
    assert sample.shape == (batch, action_dim)
    assert mu.shape == (batch, action_dim)
    assert jnp.allclose(sample, sample_ref, atol=1e-4, rtol=1e-4)
    assert jnp.allclose(mu, mu_ref, atol=1e-4, rtol=1e-4)

    # --- bf16-matmul path (fast MXU path on v6e/v7x; accumulate + ELU/LN in f32) ---
    packed_bf16 = prepare_packed_params(params, matmul_dtype=jnp.bfloat16)
    fwd_bf16 = make_actor_forward(packed_bf16, deterministic=False, tile_b=tile_b)
    sample_bf16 = jax.block_until_ready(fwd_bf16(obs, noise))
    sample_bf16_ref = actor_forward_ref(params, obs, noise, deterministic=False,
                                        matmul_dtype=jnp.bfloat16)
    assert jnp.allclose(sample_bf16, sample_bf16_ref, atol=1e-2, rtol=1e-2)

    # TODO(synk): visual-obs Encoder branch (enable_vis_obs=True) and
    # evaluate_actions_log_probs are not reproduced; only the state-obs MLP
    # forward() path is implemented.
    print("KERNEL_OK")
</pallas_src>

<mosaic_0001>
module attributes {stable_mosaic.version = 11 : i64} {
  func.func @kernel(%arg0: i32, %arg1: memref<128x128xf32, #tpu.memory_space<vmem>>, %arg2: memref<8x128xf32, #tpu.memory_space<vmem>>, %arg3: memref<128x128xf32, #tpu.memory_space<vmem>>, %arg4: memref<128x128xf32, #tpu.memory_space<vmem>>, %arg5: memref<128x128xf32, #tpu.memory_space<vmem>>, %arg6: memref<128x128xf32, #tpu.memory_space<vmem>>, %arg7: memref<128x128xf32, #tpu.memory_space<vmem>>) attributes {dimension_semantics = [#tpu.dimension_semantics<parallel>], iteration_bounds = array<i64: 2>, scalar_prefetch = 0 : i64, scratch_operands = 0 : i64, tpu.core_type = #tpu.core_type<tc>, window_params = [{transform_indices = @transform_0, window_bounds = array<i64: 128, 128>}, {pipeline_mode = #tpu.pipeline_mode<synchronous>, transform_indices = @transform_1, window_bounds = array<i64: 8, 128>}, {pipeline_mode = #tpu.pipeline_mode<synchronous>, transform_indices = @transform_2, window_bounds = array<i64: 128, 128>}, {pipeline_mode = #tpu.pipeline_mode<synchronous>, transform_indices = @transform_3, window_bounds = array<i64: 128, 128>}, {pipeline_mode = #tpu.pipeline_mode<synchronous>, transform_indices = @transform_4, window_bounds = array<i64: 128, 128>}, {transform_indices = @transform_5, window_bounds = array<i64: 128, 128>}, {transform_indices = @transform_6, window_bounds = array<i64: 128, 128>}]} {
    %c0 = arith.constant 0 : index
    %c0_0 = arith.constant 0 : index
    %0 = vector.load %arg2[%c0, %c0_0] : memref<8x128xf32, #tpu.memory_space<vmem>>, vector<8x128xf32>
    %c0_1 = arith.constant 0 : index
    %c0_2 = arith.constant 0 : index
    %1 = vector.load %arg1[%c0_1, %c0_2] : memref<128x128xf32, #tpu.memory_space<vmem>>, vector<128x128xf32>
    %c0_3 = arith.constant 0 : index
    %c0_4 = arith.constant 0 : index
    %2 = vector.load %arg3[%c0_3, %c0_4] : memref<128x128xf32, #tpu.memory_space<vmem>>, vector<128x128xf32>
    %cst = arith.constant dense<0.000000e+00> : vector<128x128xf32>
    %3 = tpu.matmul %1, %2, %cst {dimension_numbers = #tpu.dot_dimension_numbers<[1], [0], [0], [1], [0, 0, 1, 1], [], []>} : vector<128x128xf32>, vector<128x128xf32>, vector<128x128xf32> -> vector<128x128xf32>
    %4 = vector.extract_strided_slice %0 {offsets = [0, 0], sizes = [1, 128], strides = [1, 1]} : vector<8x128xf32> to vector<1x128xf32>
    %5 = vector.broadcast %4 : vector<1x128xf32> to vector<128x128xf32>
    %6 = arith.addf %3, %5 : vector<128x128xf32>
    %cst_5 = arith.constant 0.000000e+00 : f32
    %7 = vector.broadcast %cst_5 : f32 to vector<128x128xf32>
    %8 = arith.cmpf ogt, %6, %7 : vector<128x128xf32>
    %cst_6 = arith.constant 0.000000e+00 : f32
    %9 = vector.broadcast %cst_6 : f32 to vector<128x128xf32>
    %10 = arith.minimumf %6, %9 : vector<128x128xf32>
    %11 = math.exp %10 : vector<128x128xf32>
    %cst_7 = arith.constant 1.000000e+00 : f32
    %12 = vector.broadcast %cst_7 : f32 to vector<128x128xf32>
    %13 = arith.subf %11, %12 : vector<128x128xf32>
    %14 = arith.select %8, %6, %13 : vector<128x128xi1>, vector<128x128xf32>
    %cst_8 = arith.constant dense<0.000000e+00> : vector<128xf32>
    %15 = vector.multi_reduction <add>, %14, %cst_8 [1] : vector<128x128xf32> to vector<128xf32>
    %16 = vector.shape_cast %15 : vector<128xf32> to vector<128x1xf32>
    %cst_9 = arith.constant 1.562500e-02 : f32
    %17 = vector.broadcast %cst_9 : f32 to vector<128x1xf32>
    %18 = arith.mulf %16, %17 : vector<128x1xf32>
    %19 = vector.broadcast %18 : vector<128x1xf32> to vector<128x128xf32>
    %20 = arith.subf %14, %19 : vector<128x128xf32>
    %21 = tpu.iota {dimensions = array<i32: 1>} : vector<1x128xi32>
    %c64_i32 = arith.constant 64 : i32
    %22 = vector.broadcast %c64_i32 : i32 to vector<1x128xi32>
    %23 = arith.cmpi slt, %21, %22 : vector<1x128xi32>
    %24 = arith.extui %23 : vector<1x128xi1> to vector<1x128xi32>
    %25 = arith.sitofp %24 : vector<1x128xi32> to vector<1x128xf32>
    %26 = vector.broadcast %25 : vector<1x128xf32> to vector<128x128xf32>
    %27 = arith.mulf %20, %26 : vector<128x128xf32>
    %28 = arith.mulf %27, %27 : vector<128x128xf32>
    %cst_10 = arith.constant dense<0.000000e+00> : vector<128xf32>
    %29 = vector.multi_reduction <add>, %28, %cst_10 [1] : vector<128x128xf32> to vector<128xf32>
    %30 = vector.shape_cast %29 : vector<128xf32> to vector<128x1xf32>
    %cst_11 = arith.constant 1.562500e-02 : f32
    %31 = vector.broadcast %cst_11 : f32 to vector<128x1xf32>
    %32 = arith.mulf %30, %31 : vector<128x1xf32>
    %cst_12 = arith.constant 9.99999974E-6 : f32
    %33 = vector.broadcast %cst_12 : f32 to vector<128x1xf32>
    %34 = arith.addf %32, %33 : vector<128x1xf32>
    %35 = math.rsqrt %34 : vector<128x1xf32>
    %36 = vector.broadcast %35 : vector<128x1xf32> to vector<128x128xf32>
    %37 = arith.mulf %27, %36 : vector<128x128xf32>
    %38 = vector.extract_strided_slice %0 {offsets = [1, 0], sizes = [1, 128], strides = [1, 1]} : vector<8x128xf32> to vector<1x128xf32>
    %39 = vector.extract_strided_slice %0 {offsets = [2, 0], sizes = [1, 128], strides = [1, 1]} : vector<8x128xf32> to vector<1x128xf32>
    %40 = vector.broadcast %38 : vector<1x128xf32> to vector<128x128xf32>
    %41 = arith.mulf %37, %40 : vector<128x128xf32>
    %42 = vector.broadcast %39 : vector<1x128xf32> to vector<128x128xf32>
    %43 = arith.addf %41, %42 : vector<128x128xf32>
    %c0_13 = arith.constant 0 : index
    %c0_14 = arith.constant 0 : index
    %44 = vector.load %arg4[%c0_13, %c0_14] : memref<128x128xf32, #tpu.memory_space<vmem>>, vector<128x128xf32>
    %cst_15 = arith.constant dense<0.000000e+00> : vector<128x128xf32>
    %45 = tpu.matmul %43, %44, %cst_15 {dimension_numbers = #tpu.dot_dimension_numbers<[1], [0], [0], [1], [0, 0, 1, 1], [], []>} : vector<128x128xf32>, vector<128x128xf32>, vector<128x128xf32> -> vector<128x128xf32>
    %46 = vector.extract_strided_slice %0 {offsets = [3, 0], sizes = [1, 128], strides = [1, 1]} : vector<8x128xf32> to vector<1x128xf32>
    %47 = vector.broadcast %46 : vector<1x128xf32> to vector<128x128xf32>
    %48 = arith.addf %45, %47 : vector<128x128xf32>
    %cst_16 = arith.constant 0.000000e+00 : f32
    %49 = vector.broadcast %cst_16 : f32 to vector<128x128xf32>
    %50 = arith.cmpf ogt, %48, %49 : vector<128x128xf32>
    %cst_17 = arith.constant 0.000000e+00 : f32
    %51 = vector.broadcast %cst_17 : f32 to vector<128x128xf32>
    %52 = arith.minimumf %48, %51 : vector<128x128xf32>
    %53 = math.exp %52 : vector<128x128xf32>
    %cst_18 = arith.constant 1.000000e+00 : f32
    %54 = vector.broadcast %cst_18 : f32 to vector<128x128xf32>
    %55 = arith.subf %53, %54 : vector<128x128xf32>
    %56 = arith.select %50, %48, %55 : vector<128x128xi1>, vector<128x128xf32>
    %cst_19 = arith.constant dense<0.000000e+00> : vector<128xf32>
    %57 = vector.multi_reduction <add>, %56, %cst_19 [1] : vector<128x128xf32> to vector<128xf32>
    %58 = vector.shape_cast %57 : vector<128xf32> to vector<128x1xf32>
    %cst_20 = arith.constant 1.562500e-02 : f32
    %59 = vector.broadcast %cst_20 : f32 to vector<128x1xf32>
    %60 = arith.mulf %58, %59 : vector<128x1xf32>
    %61 = vector.broadcast %60 : vector<128x1xf32> to vector<128x128xf32>
    %62 = arith.subf %56, %61 : vector<128x128xf32>
    %63 = tpu.iota {dimensions = array<i32: 1>} : vector<1x128xi32>
    %c64_i32_21 = arith.constant 64 : i32
    %64 = vector.broadcast %c64_i32_21 : i32 to vector<1x128xi32>
    %65 = arith.cmpi slt, %63, %64 : vector<1x128xi32>
    %66 = arith.extui %65 : vector<1x128xi1> to vector<1x128xi32>
    %67 = arith.sitofp %66 : vector<1x128xi32> to vector<1x128xf32>
    %68 = vector.broadcast %67 : vector<1x128xf32> to vector<128x128xf32>
    %69 = arith.mulf %62, %68 : vector<128x128xf32>
    %70 = arith.mulf %69, %69 : vector<128x128xf32>
    %cst_22 = arith.constant dense<0.000000e+00> : vector<128xf32>
    %71 = vector.multi_reduction <add>, %70, %cst_22 [1] : vector<128x128xf32> to vector<128xf32>
    %72 = vector.shape_cast %71 : vector<128xf32> to vector<128x1xf32>
    %cst_23 = arith.constant 1.562500e-02 : f32
    %73 = vector.broadcast %cst_23 : f32 to vector<128x1xf32>
    %74 = arith.mulf %72, %73 : vector<128x1xf32>
    %cst_24 = arith.constant 9.99999974E-6 : f32
    %75 = vector.broadcast %cst_24 : f32 to vector<128x1xf32>
    %76 = arith.addf %74, %75 : vector<128x1xf32>
    %77 = math.rsqrt %76 : vector<128x1xf32>
    %78 = vector.broadcast %77 : vector<128x1xf32> to vector<128x128xf32>
    %79 = arith.mulf %69, %78 : vector<128x128xf32>
    %80 = vector.extract_strided_slice %0 {offsets = [4, 0], sizes = [1, 128], strides = [1, 1]} : vector<8x128xf32> to vector<1x128xf32>
    %81 = vector.extract_strided_slice %0 {offsets = [5, 0], sizes = [1, 128], strides = [1, 1]} : vector<8x128xf32> to vector<1x128xf32>
    %82 = vector.broadcast %80 : vector<1x128xf32> to vector<128x128xf32>
    %83 = arith.mulf %79, %82 : vector<128x128xf32>
    %84 = vector.broadcast %81 : vector<1x128xf32> to vector<128x128xf32>
    %85 = arith.addf %83, %84 : vector<128x128xf32>
    %c0_25 = arith.constant 0 : index
    %c0_26 = arith.constant 0 : index
    %86 = vector.load %arg5[%c0_25, %c0_26] : memref<128x128xf32, #tpu.memory_space<vmem>>, vector<128x128xf32>
    %cst_27 = arith.constant dense<0.000000e+00> : vector<128x128xf32>
    %87 = tpu.matmul %85, %86, %cst_27 {dimension_numbers = #tpu.dot_dimension_numbers<[1], [0], [0], [1], [0, 0, 1, 1], [], []>} : vector<128x128xf32>, vector<128x128xf32>, vector<128x128xf32> -> vector<128x128xf32>
    %88 = vector.extract_strided_slice %0 {offsets = [6, 0], sizes = [1, 128], strides = [1, 1]} : vector<8x128xf32> to vector<1x128xf32>
    %89 = vector.broadcast %88 : vector<1x128xf32> to vector<128x128xf32>
    %90 = arith.addf %87, %89 : vector<128x128xf32>
    %91 = vector.extract_strided_slice %0 {offsets = [7, 0], sizes = [1, 128], strides = [1, 1]} : vector<8x128xf32> to vector<1x128xf32>
    %92 = math.exp %91 : vector<1x128xf32>
    %c0_28 = arith.constant 0 : index
    %c0_29 = arith.constant 0 : index
    %93 = vector.load %arg6[%c0_28, %c0_29] : memref<128x128xf32, #tpu.memory_space<vmem>>, vector<128x128xf32>
    %94 = vector.broadcast %92 : vector<1x128xf32> to vector<128x128xf32>
    %95 = arith.mulf %94, %93 : vector<128x128xf32>
    %96 = arith.addf %90, %95 : vector<128x128xf32>
    %c0_30 = arith.constant 0 : index
    %c0_31 = arith.constant 0 : index
    %97 = vector.load %arg7[%c0_30, %c0_31] : memref<128x128xf32, #tpu.memory_space<vmem>>, vector<128x128xf32>
    tpu.vector_store %arg7[%c0_30, %c0_31], %96 {strides = array<i32>} : memref<128x128xf32, #tpu.memory_space<vmem>>, vector<128x128xf32>,
    return
  }
  func.func @transform_0(%arg0: i32) -> (i32, i32) {
    %c0_i32 = arith.constant 0 : i32
    %c0_i32_0 = arith.constant 0 : i32
    return %arg0, %c0_i32 : i32, i32
  }
  func.func @transform_1(%arg0: i32) -> (i32, i32) {
    %c0_i32 = arith.constant 0 : i32
    %c0_i32_0 = arith.constant 0 : i32
    %c0_i32_1 = arith.constant 0 : i32
    return %c0_i32, %c0_i32_0 : i32, i32
  }
  func.func @transform_2(%arg0: i32) -> (i32, i32) {
    %c0_i32 = arith.constant 0 : i32
    %c0_i32_0 = arith.constant 0 : i32
    %c0_i32_1 = arith.constant 0 : i32
    return %c0_i32, %c0_i32_0 : i32, i32
  }
  func.func @transform_3(%arg0: i32) -> (i32, i32) {
    %c0_i32 = arith.constant 0 : i32
    %c0_i32_0 = arith.constant 0 : i32
    %c0_i32_1 = arith.constant 0 : i32
    return %c0_i32, %c0_i32_0 : i32, i32
  }
  func.func @transform_4(%arg0: i32) -> (i32, i32) {
    %c0_i32 = arith.constant 0 : i32
    %c0_i32_0 = arith.constant 0 : i32
    %c0_i32_1 = arith.constant 0 : i32
    return %c0_i32, %c0_i32_0 : i32, i32
  }
  func.func @transform_5(%arg0: i32) -> (i32, i32) {
    %c0_i32 = arith.constant 0 : i32
    %c0_i32_0 = arith.constant 0 : i32
    return %arg0, %c0_i32 : i32, i32
  }
  func.func @transform_6(%arg0: i32) -> (i32, i32) {
    %c0_i32 = arith.constant 0 : i32
    %c0_i32_0 = arith.constant 0 : i32
    return %arg0, %c0_i32 : i32, i32
  }
}

</mosaic_0001>

<llo_original>
// kernel: fwd.1
$region0: #{fwd.1}
  #allocation0 [shape = 'u32[]', space=smem, size = 0x4, offset = 0x4, fixed_abs, tag = 'smem constant byte address 0x4 - core index']
  #allocation1 [shape = 'u32[144,128]{1,0:T(1,128)}', space=vmem, size = 0x12000, scoped, tag = 'internal scratch']
  %s0 = inlined_call_operand.vmem [shape: f32[256,128], index: 0, kind: input, shape index: {}]
  %s1 = inlined_call_operand.vmem [shape: f32[8,128], index: 1, kind: input, shape index: {}]
  %s2 = inlined_call_operand.vmem [shape: f32[128,128], index: 2, kind: input, shape index: {}]
  %s3 = inlined_call_operand.vmem [shape: f32[128,128], index: 3, kind: input, shape index: {}]
  %s4 = inlined_call_operand.vmem [shape: f32[128,128], index: 4, kind: input, shape index: {}]
  %s5 = inlined_call_operand.vmem [shape: f32[256,128], index: 5, kind: input, shape index: {}]
  %s6 = inlined_call_operand.vmem [shape: f32[256,128], index: 6, kind: output, shape index: {}]
  %s7 = sld [smem:[#allocation0]]
  $region57: #{fwd.1} parent=0
    _
  %s9 = ssub.s32 1, %s7
  %s10 = scalar_select 0, %s9, %s7
  loop: start=0, step=1, limit=4
  $region2: #{fwd.1} parent=0 // loop_pre_header
    _
  $region3: #{fwd.1} parent=0 // loop_header
    %s12 = sphi 0, %s16
    %p13 = scmp.ge.s32.totalorder %s12, 4
    %s22 = sphi 0, %s24
    %s25 = sphi 0, %s22
    %s26 = sphi 0, %s25
    %s42 = sphi 0, %s26
    %s46 = sphi 0, %s46
    %s48 = sphi 0, %s46
    %s49 = sphi 0, %s48
    %s63 = sphi 0, %s49
    %s67 = sphi 0, %s67
    %s69 = sphi 0, %s67
    %s70 = sphi 0, %s69
    %s84 = sphi 0, %s70
    %s88 = sphi 0, %s88
    %s90 = sphi 0, %s88
    %s91 = sphi 0, %s90
    %s105 = sphi 0, %s91
    %s109 = sphi 0, %s109
    %s111 = sphi 0, %s109
    %s112 = sphi 0, %s111
    %s126 = sphi 0, %s112
    %s132 = sphi 0, %s134
    %s135 = sphi 0, %s132
    %s136 = sphi 0, %s135
    %s152 = sphi 0, %s136
    %s158 = sphi 0, %s160
    %s161 = sphi 0, %s158
    %s162 = sphi 0, %s161
    %s178 = sphi 0, %s162
  $region4: #{fwd.1} parent=0 // loop_header_branch
    %15 = sbr.rel (%p13) target = $region8
  $region5: #{fwd.1} parent=0 // loop_body
    %s17 = ssub.s32 %s12, 1
    %s18 = ssub.s32 %s12, 2
    %s19 = sadd.s32 %s12, 1
    %s20 = ssub.s32 %s12, %s19
    %p21 = scmp.eq.s32.totalorder %s20, 0
    %s23 = sadd.s32 %s22, 1
    %s24 = scalar_select %p21, %s22, %s23
    %p27 = pneg %p21
    %p28 = scmp.eq.s32.totalorder %s12, 1
    %p29 = por %p27, %p28
    %p30 = scmp.ne.s32.totalorder %s22, %s25
    %p31 = scmp.eq.s32.totalorder %s12, 0
    %p32 = por %p30, %p31
    %p33 = scmp.ne.s32.totalorder %s22, %s25
    %p34 = scmp.eq.s32.totalorder %s17, 1
    %p35 = por %p33, %p34
    %p36 = scmp.ne.s32.totalorder %s25, %s26
    %p37 = scmp.eq.s32.totalorder %s17, 0
    %p38 = por %p36, %p37
    %p39 = scmp.ne.s32.totalorder %s25, %s26
    %p40 = scmp.eq.s32.totalorder %s18, 1
    %p41 = por %p39, %p40
    %p43 = scmp.ne.s32.totalorder %s26, %s42
    %p44 = scmp.eq.s32.totalorder %s18, 0
    %p45 = por %p43, %p44
    %s47 = sadd.s32 %s46, 1
    %p50 = scmp.eq.s32.totalorder %s12, 1
    %p51 = scmp.ne.s32.totalorder %s46, %s48
    %p52 = scmp.eq.s32.totalorder %s12, 0
    %p53 = por %p51, %p52
    %p54 = scmp.ne.s32.totalorder %s46, %s48
    %p55 = scmp.eq.s32.totalorder %s17, 1
    %p56 = por %p54, %p55
    %p57 = scmp.ne.s32.totalorder %s48, %s49
    %p58 = scmp.eq.s32.totalorder %s17, 0
    %p59 = por %p57, %p58
    %p60 = scmp.ne.s32.totalorder %s48, %s49
    %p61 = scmp.eq.s32.totalorder %s18, 1
    %p62 = por %p60, %p61
    %p64 = scmp.ne.s32.totalorder %s49, %s63
    %p65 = scmp.eq.s32.totalorder %s18, 0
    %p66 = por %p64, %p65
    %s68 = sadd.s32 %s67, 1
    %p71 = scmp.eq.s32.totalorder %s12, 1
    %p72 = scmp.ne.s32.totalorder %s67, %s69
    %p73 = scmp.eq.s32.totalorder %s12, 0
    %p74 = por %p72, %p73
    %p75 = scmp.ne.s32.totalorder %s67, %s69
    %p76 = scmp.eq.s32.totalorder %s17, 1
    %p77 = por %p75, %p76
    %p78 = scmp.ne.s32.totalorder %s69, %s70
    %p79 = scmp.eq.s32.totalorder %s17, 0
    %p80 = por %p78, %p79
    %p81 = scmp.ne.s32.totalorder %s69, %s70
    %p82 = scmp.eq.s32.totalorder %s18, 1
    %p83 = por %p81, %p82
    %p85 = scmp.ne.s32.totalorder %s70, %s84
    %p86 = scmp.eq.s32.totalorder %s18, 0
    %p87 = por %p85, %p86
    %s89 = sadd.s32 %s88, 1
    %p92 = scmp.eq.s32.totalorder %s12, 1
    %p93 = scmp.ne.s32.totalorder %s88, %s90
    %p94 = scmp.eq.s32.totalorder %s12, 0
    %p95 = por %p93, %p94
    %p96 = scmp.ne.s32.totalorder %s88, %s90
    %p97 = scmp.eq.s32.totalorder %s17, 1
    %p98 = por %p96, %p97
    %p99 = scmp.ne.s32.totalorder %s90, %s91
    %p100 = scmp.eq.s32.totalorder %s17, 0
    %p101 = por %p99, %p100
    %p102 = scmp.ne.s32.totalorder %s90, %s91
    %p103 = scmp.eq.s32.totalorder %s18, 1
    %p104 = por %p102, %p103
    %p106 = scmp.ne.s32.totalorder %s91, %s105
    %p107 = scmp.eq.s32.totalorder %s18, 0
    %p108 = por %p106, %p107
    %s110 = sadd.s32 %s109, 1
    %p113 = scmp.eq.s32.totalorder %s12, 1
    %p114 = scmp.ne.s32.totalorder %s109, %s111
    %p115 = scmp.eq.s32.totalorder %s12, 0
    %p116 = por %p114, %p115
    %p117 = scmp.ne.s32.totalorder %s109, %s111
    %p118 = scmp.eq.s32.totalorder %s17, 1
    %p119 = por %p117, %p118
    %p120 = scmp.ne.s32.totalorder %s111, %s112
    %p121 = scmp.eq.s32.totalorder %s17, 0
    %p122 = por %p120, %p121
    %p123 = scmp.ne.s32.totalorder %s111, %s112
    %p124 = scmp.eq.s32.totalorder %s18, 1
    %p125 = por %p123, %p124
    %p127 = scmp.ne.s32.totalorder %s112, %s126
    %p128 = scmp.eq.s32.totalorder %s18, 0
    %p129 = por %p127, %p128
    %s130 = ssub.s32 %s12, %s19
    %p131 = scmp.eq.s32.totalorder %s130, 0
    %s133 = sadd.s32 %s132, 1
    %s134 = scalar_select %p131, %s132, %s133
    %p137 = pneg %p131
    %p138 = scmp.eq.s32.totalorder %s12, 1
    %p139 = por %p137, %p138
    %p140 = scmp.ne.s32.totalorder %s132, %s135
    %p141 = scmp.eq.s32.totalorder %s12, 0
    %p142 = por %p140, %p141
    %p143 = scmp.ne.s32.totalorder %s132, %s135
    %p144 = scmp.eq.s32.totalorder %s17, 1
    %p145 = por %p143, %p144
    %p146 = scmp.ne.s32.totalorder %s135, %s136
    %p147 = scmp.eq.s32.totalorder %s17, 0
    %p148 = por %p146, %p147
    %p149 = scmp.ne.s32.totalorder %s135, %s136
    %p150 = scmp.eq.s32.totalorder %s18, 1
    %p151 = por %p149, %p150
    %p153 = scmp.ne.s32.totalorder %s136, %s152
    %p154 = scmp.eq.s32.totalorder %s18, 0
    %p155 = por %p153, %p154
    %s156 = ssub.s32 %s12, %s19
    %p157 = scmp.eq.s32.totalorder %s156, 0
    %s159 = sadd.s32 %s158, 1
    %s160 = scalar_select %p157, %s158, %s159
    %p163 = pneg %p157
    %p164 = scmp.eq.s32.totalorder %s12, 1
    %p165 = por %p163, %p164
    %p166 = scmp.ne.s32.totalorder %s158, %s161
    %p167 = scmp.eq.s32.totalorder %s12, 0
    %p168 = por %p166, %p167
    %p169 = scmp.ne.s32.totalorder %s158, %s161
    %p170 = scmp.eq.s32.totalorder %s17, 1
    %p171 = por %p169, %p170
    %p172 = scmp.ne.s32.totalorder %s161, %s162
    %p173 = scmp.eq.s32.totalorder %s17, 0
    %p174 = por %p172, %p173
    %p175 = scmp.ne.s32.totalorder %s161, %s162
    %p176 = scmp.eq.s32.totalorder %s18, 1
    %p177 = por %p175, %p176
    %p179 = scmp.ne.s32.totalorder %s162, %s178
    %p180 = scmp.eq.s32.totalorder %s18, 0
    %p181 = por %p179, %p180
    %p182 = scmp.le.s32.totalorder 1, %s12
    %p183 = scmp.lt.s32.totalorder %s12, 3
    %p184 = pnand %p182, %p183
    %p185 = pneg %p184
    // Predicated region
    $region9: #{fwd.1} parent=5 // pred_check
      _
    $region10: #{fwd.1} parent=5 // pred_check_branch
      %187 = sbr.rel (%p184) target = $region12
    $region11: #{fwd.1} parent=5 // pred_region
      %s188 = ssub.s32 %s12, 1
      // Predicated region
      $region13: #{fwd.1} parent=11 // pred_check
        %p189 = pneg %p59
      $region14: #{fwd.1} parent=11 // pred_check_branch
        %191 = sbr.rel (%p189) target = $region16
      $region15: #{fwd.1} parent=11 // pred_region
        _
      $region16: #{fwd.1} parent=11 // pred_fallthru
        _
      // Predicated region
      $region17: #{fwd.1} parent=11 // pred_check
        %p192 = pneg %p80
      $region18: #{fwd.1} parent=11 // pred_check_branch
        %194 = sbr.rel (%p192) target = $region20
      $region19: #{fwd.1} parent=11 // pred_region
        _
      $region20: #{fwd.1} parent=11 // pred_fallthru
        _
      // Predicated region
      $region21: #{fwd.1} parent=11 // pred_check
        %p195 = pneg %p101
      $region22: #{fwd.1} parent=11 // pred_check_branch
        %197 = sbr.rel (%p195) target = $region24
      $region23: #{fwd.1} parent=11 // pred_region
        _
      $region24: #{fwd.1} parent=11 // pred_fallthru
        _
      // Predicated region
      $region25: #{fwd.1} parent=11 // pred_check
        %p198 = pneg %p122
      $region26: #{fwd.1} parent=11 // pred_check_branch
        %200 = sbr.rel (%p198) target = $region28
      $region27: #{fwd.1} parent=11 // pred_region
        _
      $region28: #{fwd.1} parent=11 // pred_fallthru
        _
    $region12: #{fwd.1} parent=5 // pred_fallthru
      _
    %p201 = scmp.lt.s32.totalorder %s12, 2
    // Predicated region
    $region29: #{fwd.1} parent=5 // pred_check
      %p202 = pneg %p201
    $region30: #{fwd.1} parent=5 // pred_check_branch
      %204 = sbr.rel (%p202) target = $region32
    $region31: #{fwd.1} parent=5 // pred_region
      // Predicated region
      $region33: #{fwd.1} parent=31 // pred_check
        %p205 = pneg %p32
      $region34: #{fwd.1} parent=31 // pred_check_branch
        %207 = sbr.rel (%p205) target = $region36
      $region35: #{fwd.1} parent=31 // pred_region
        %s208 = smul.u32 16, %s12
        %p209 = scmp.lt.s32.totalorder %s208, 31
        %s210 = scalar_select %p209, %s208, 31
        %s211 = smul.addr %s210, 8
        %s212 = scalar_lea.vmem %s0, %s211
        %s213 = smul.u32 16, %s12
      $region36: #{fwd.1} parent=31 // pred_fallthru
        _
      // Predicated region
      $region37: #{fwd.1} parent=31 // pred_check
        %p214 = pneg %p142
      $region38: #{fwd.1} parent=31 // pred_check_branch
        %216 = sbr.rel (%p214) target = $region40
      $region39: #{fwd.1} parent=31 // pred_region
        %s217 = smul.u32 16, %s12
        %p218 = scmp.lt.s32.totalorder %s217, 31
        %s219 = scalar_select %p218, %s217, 31
        %s220 = smul.addr %s219, 8
        %s221 = scalar_lea.vmem %s5, %s220
        %s222 = smul.u32 16, %s12
      $region40: #{fwd.1} parent=31 // pred_fallthru
        _
    $region32: #{fwd.1} parent=5 // pred_fallthru
      _
    %p223 = scmp.le.s32.totalorder 1, %s12
    %p224 = scmp.lt.s32.totalorder %s12, 3
    %p225 = pnand %p223, %p224
    %p226 = pneg %p225
    // Predicated region
    $region41: #{fwd.1} parent=5 // pred_check
      _
    $region42: #{fwd.1} parent=5 // pred_check_branch
      %228 = sbr.rel (%p225) target = $region44
    $region43: #{fwd.1} parent=5 // pred_region
      %s229 = ssub.s32 %s12, 1
      %s230 = smul.u32 16, %s17
      %p231 = scmp.lt.s32.totalorder %s230, 31
      %s232 = scalar_select %p231, %s230, 31
      %s233 = smul.addr %s232, 8
      %s234 = scalar_lea.vmem %s0, %s233
      %p235 = pneg %p38
      %p236 = pneg %p35
      %p237 = pneg %p59
      %p238 = pneg %p56
      %p239 = pneg %p80
      %p240 = pneg %p77
      %p241 = pneg %p101
      %p242 = pneg %p98
      %p243 = pneg %p122
      %p244 = pneg %p119
      %s245 = smul.u32 16, %s17
      %p246 = scmp.lt.s32.totalorder %s245, 31
      %s247 = scalar_select %p246, %s245, 31
      %s248 = smul.addr %s247, 8
      %s249 = scalar_lea.vmem %s5, %s248
      %p250 = pneg %p148
      %p251 = pneg %p145
      %p252 = pneg %p174
      %p253 = pneg %p171
      %s254 = smul.u32 16, %s17
      %p255 = scmp.lt.s32.totalorder %s254, 31
      %s256 = scalar_select %p255, %s254, 31
      %s257 = smul.addr %s256, 8
      %s258 = scalar_lea.vmem %s6, %s257
      %s259 = smul.u32 16, %s17
      %p260 = scmp.lt.s32.totalorder %s259, 31
      %s261 = scalar_select %p260, %s259, 31
      %s262 = smul.addr %s261, 8
      %s263 = scalar_lea.vmem %s0, %s262
      %s264 = smul.u32 16, %s17
      %s265 = smul.u32 16, %s17
      %p266 = scmp.lt.s32.totalorder %s265, 31
      %s267 = scalar_select %p266, %s265, 31
      %s268 = smul.addr %s267, 8
      %s269 = scalar_lea.vmem %s5, %s268
      %s270 = smul.u32 16, %s17
      %s271 = smul.u32 16, %s17
      %p272 = scmp.lt.s32.totalorder %s271, 31
      %s273 = scalar_select %p272, %s271, 31
      %s274 = smul.addr %s273, 8
      %s275 = scalar_lea.vmem %s6, %s274
      %s276 = smul.u32 16, %s17
      %v277 = vld [vmem:[%s1] sm:$0xff]
      %v278 = vld [vmem:[%s263] sm:$0xff]
      %v279 = vld [vmem:[%s263 + $0x8] sm:$0xff]
      %v280 = vld [vmem:[%s263 + $0x10] sm:$0xff]
      %v281 = vld [vmem:[%s263 + $0x18] sm:$0xff]
      %v282 = vld [vmem:[%s263 + $0x20] sm:$0xff]
      %v283 = vld [vmem:[%s263 + $0x28] sm:$0xff]
      %v284 = vld [vmem:[%s263 + $0x30] sm:$0xff]
      %v285 = vld [vmem:[%s263 + $0x38] sm:$0xff]
      %v286 = vld [vmem:[%s263 + $0x40] sm:$0xff]
      %v287 = vld [vmem:[%s263 + $0x48] sm:$0xff]
      %v288 = vld [vmem:[%s263 + $0x50] sm:$0xff]
      %v289 = vld [vmem:[%s263 + $0x58] sm:$0xff]
      %v290 = vld [vmem:[%s263 + $0x60] sm:$0xff]
      %v291 = vld [vmem:[%s263 + $0x68] sm:$0xff]
      %v292 = vld [vmem:[%s263 + $0x70] sm:$0xff]
      %v293 = vld [vmem:[%s263 + $0x78] sm:$0xff]
      %v294 = vld [vmem:[%s2] sm:$0xff]
      %v295 = vld [vmem:[%s2 + $0x8] sm:$0xff]
      %v296 = vld [vmem:[%s2 + $0x10] sm:$0xff]
      %v297 = vld [vmem:[%s2 + $0x18] sm:$0xff]
      %v298 = vld [vmem:[%s2 + $0x20] sm:$0xff]
      %v299 = vld [vmem:[%s2 + $0x28] sm:$0xff]
      %v300 = vld [vmem:[%s2 + $0x30] sm:$0xff]
      %v301 = vld [vmem:[%s2 + $0x38] sm:$0xff]
      %v302 = vld [vmem:[%s2 + $0x40] sm:$0xff]
      %v303 = vld [vmem:[%s2 + $0x48] sm:$0xff]
      %v304 = vld [vmem:[%s2 + $0x50] sm:$0xff]
      %v305 = vld [vmem:[%s2 + $0x58] sm:$0xff]
      %v306 = vld [vmem:[%s2 + $0x60] sm:$0xff]
      %v307 = vld [vmem:[%s2 + $0x68] sm:$0xff]
      %v308 = vld [vmem:[%s2 + $0x70] sm:$0xff]
      %v309 = vld [vmem:[%s2 + $0x78] sm:$0xff]
      %v310 = vlaneseq
      %v311 = vshrl.u32 %v310, 7
      %v312 = vsub.s32 0, %v311
      %v313 = vrot.slane %v277, %v312
      %314 = vmatprep.subr.mxu0 0.0
      %315 = vmatpush1.msra.mxu0 %v309
      %316 = vmatprep.subr.mxu0 0.0
      %317 = vmatpush1.msra.mxu0 %v308
      %318 = vmatprep.subr.mxu0 0.0
      %319 = vmatpush1.msra.mxu0 %v307
      %320 = vmatprep.subr.mxu0 0.0
      %321 = vmatpush1.msra.mxu0 %v306
      %322 = vmatprep.subr.mxu0 0.0
      %323 = vmatpush1.msra.mxu0 %v305
      %324 = vmatprep.subr.mxu0 0.0
      %325 = vmatpush1.msra.mxu0 %v304
      %326 = vmatprep.subr.mxu0 0.0
      %327 = vmatpush1.msra.mxu0 %v303
      %328 = vmatprep.subr.mxu0 0.0
      %329 = vmatpush1.msra.mxu0 %v302
      %330 = vmatprep.subr.mxu0 0.0
      %331 = vmatpush1.msra.mxu0 %v301
      %332 = vmatprep.subr.mxu0 0.0
      %333 = vmatpush1.msra.mxu0 %v300
      %334 = vmatprep.subr.mxu0 0.0
      %335 = vmatpush1.msra.mxu0 %v299
      %336 = vmatprep.subr.mxu0 0.0
      %337 = vmatpush1.msra.mxu0 %v298
      %338 = vmatprep.subr.mxu0 0.0
      %339 = vmatpush1.msra.mxu0 %v297
      %340 = vmatprep.subr.mxu0 0.0
      %341 = vmatpush1.msra.mxu0 %v296
      %342 = vmatprep.subr.mxu0 0.0
      %343 = vmatpush1.msra.mxu0 %v295
      %344 = vmatprep.subr.mxu0 0.0
      %345 = vmatpush1.msra.mxu0 %v294
      %346 = vmatprep.subr.mxu0 0.0
      %347 = vmatpush2.msra.mxu0 0.0
      %348 = vmatprep.subr.mxu0 0.0
      %349 = vmatpush2.msra.mxu0 0.0
      %350 = vmatprep.subr.mxu0 0.0
      %351 = vmatpush2.msra.mxu0 0.0
      %352 = vmatprep.subr.mxu0 0.0
      %353 = vmatpush2.msra.mxu0 0.0
      %354 = vmatprep.subr.mxu0 0.0
      %355 = vmatpush2.msra.mxu0 0.0
      %356 = vmatprep.subr.mxu0 0.0
      %357 = vmatpush2.msra.mxu0 0.0
      %358 = vmatprep.subr.mxu0 0.0
      %359 = vmatpush2.msra.mxu0 0.0
      %360 = vmatprep.subr.mxu0 0.0
      %361 = vmatpush2.msra.mxu0 0.0
      %362 = vmatprep.subr.mxu0 0.0
      %363 = vmatpush2.msra.mxu0 0.0
      %364 = vmatprep.subr.mxu0 0.0
      %365 = vmatpush2.msra.mxu0 0.0
      %366 = vmatprep.subr.mxu0 0.0
      %367 = vmatpush2.msra.mxu0 0.0
      %368 = vmatprep.subr.mxu0 0.0
      %369 = vmatpush2.msra.mxu0 0.0
      %370 = vmatprep.subr.mxu0 0.0
      %371 = vmatpush2.msra.mxu0 0.0
      %372 = vmatprep.subr.mxu0 0.0
      %373 = vmatpush2.msra.mxu0 0.0
      %374 = vmatprep.subr.mxu0 0.0
      %375 = vmatpush2.msra.mxu0 0.0
      %376 = vmatprep.subr.mxu0 0.0
      %377 = vmatpush2.msra.mxu0 0.0
      %378 = vmatprep.mubr.f32.mxu0 0.0
      %379 = vmatmul.mubr.f32.gmra.mxu0 %v278
      %v380 = vpop.f32.mrf.mxu0
      %v381 = vadd.f32 %v313, %v380
      %v382 = vpop.f32.mrf.mxu0
      %383 = vmatprep.mubr.f32.mxu0 0.0
      %384 = vmatmul.mubr.f32.gmra.mxu0 %v279
      %v385 = vpop.f32.mrf.mxu0
      %v386 = vadd.f32 %v313, %v385
      %v387 = vpop.f32.mrf.mxu0
      %388 = vmatprep.mubr.f32.mxu0 0.0
      %389 = vmatmul.mubr.f32.gmra.mxu0 %v280
      %v390 = vpop.f32.mrf.mxu0
      %v391 = vadd.f32 %v313, %v390
      %v392 = vpop.f32.mrf.mxu0
      %393 = vmatprep.mubr.f32.mxu0 0.0
      %394 = vmatmul.mubr.f32.gmra.mxu0 %v281
      %v395 = vpop.f32.mrf.mxu0
      %v396 = vadd.f32 %v313, %v395
      %v397 = vpop.f32.mrf.mxu0
      %398 = vmatprep.mubr.f32.mxu0 0.0
      %399 = vmatmul.mubr.f32.gmra.mxu0 %v282
      %v400 = vpop.f32.mrf.mxu0
      %v401 = vadd.f32 %v313, %v400
      %v402 = vpop.f32.mrf.mxu0
      %403 = vmatprep.mubr.f32.mxu0 0.0
      %404 = vmatmul.mubr.f32.gmra.mxu0 %v283
      %v405 = vpop.f32.mrf.mxu0
      %v406 = vadd.f32 %v313, %v405
      %v407 = vpop.f32.mrf.mxu0
      %408 = vmatprep.mubr.f32.mxu0 0.0
      %409 = vmatmul.mubr.f32.gmra.mxu0 %v284
      %v410 = vpop.f32.mrf.mxu0
      %v411 = vadd.f32 %v313, %v410
      %v412 = vpop.f32.mrf.mxu0
      %413 = vmatprep.mubr.f32.mxu0 0.0
      %414 = vmatmul.mubr.f32.gmra.mxu0 %v285
      %v415 = vpop.f32.mrf.mxu0
      %v416 = vadd.f32 %v313, %v415
      %v417 = vpop.f32.mrf.mxu0
      %418 = vmatprep.mubr.f32.mxu0 0.0
      %419 = vmatmul.mubr.f32.gmra.mxu0 %v286
      %v420 = vpop.f32.mrf.mxu0
      %v421 = vadd.f32 %v313, %v420
      %v422 = vpop.f32.mrf.mxu0
      %423 = vmatprep.mubr.f32.mxu0 0.0
      %424 = vmatmul.mubr.f32.gmra.mxu0 %v287
      %v425 = vpop.f32.mrf.mxu0
      %v426 = vadd.f32 %v313, %v425
      %v427 = vpop.f32.mrf.mxu0
      %428 = vmatprep.mubr.f32.mxu0 0.0
      %429 = vmatmul.mubr.f32.gmra.mxu0 %v288
      %v430 = vpop.f32.mrf.mxu0
      %v431 = vadd.f32 %v313, %v430
      %v432 = vpop.f32.mrf.mxu0
      %433 = vmatprep.mubr.f32.mxu0 0.0
      %434 = vmatmul.mubr.f32.gmra.mxu0 %v289
      %v435 = vpop.f32.mrf.mxu0
      %v436 = vadd.f32 %v313, %v435
      %v437 = vpop.f32.mrf.mxu0
      %438 = vmatprep.mubr.f32.mxu0 0.0
      %439 = vmatmul.mubr.f32.gmra.mxu0 %v290
      %v440 = vpop.f32.mrf.mxu0
      %v441 = vadd.f32 %v313, %v440
      %v442 = vpop.f32.mrf.mxu0
      %443 = vmatprep.mubr.f32.mxu0 0.0
      %444 = vmatmul.mubr.f32.gmra.mxu0 %v291
      %v445 = vpop.f32.mrf.mxu0
      %v446 = vadd.f32 %v313, %v445
      %v447 = vpop.f32.mrf.mxu0
      %448 = vmatprep.mubr.f32.mxu0 0.0
      %449 = vmatmul.mubr.f32.gmra.mxu0 %v292
      %v450 = vpop.f32.mrf.mxu0
      %v451 = vadd.f32 %v313, %v450
      %v452 = vpop.f32.mrf.mxu0
      %453 = vmatprep.mubr.f32.mxu0 0.0
      %454 = vmatmul.mubr.f32.gmra.mxu0 %v293
      %v455 = vpop.f32.mrf.mxu0
      %v456 = vadd.f32 %v313, %v455
      %v457 = vpop.f32.mrf.mxu0
      %458 = vdwg.mxu0
      %vm459 = vcmp.gt.f32.partialorder %v381, 0.0
      %vm460 = vcmp.gt.f32.partialorder %v386, 0.0
      %vm461 = vcmp.gt.f32.partialorder %v391, 0.0
      %vm462 = vcmp.gt.f32.partialorder %v396, 0.0
      %vm463 = vcmp.gt.f32.partialorder %v401, 0.0
      %vm464 = vcmp.gt.f32.partialorder %v406, 0.0
      %vm465 = vcmp.gt.f32.partialorder %v411, 0.0
      %vm466 = vcmp.gt.f32.partialorder %v416, 0.0
      %vm467 = vcmp.gt.f32.partialorder %v421, 0.0
      %vm468 = vcmp.gt.f32.partialorder %v426, 0.0
      %vm469 = vcmp.gt.f32.partialorder %v431, 0.0
      %vm470 = vcmp.gt.f32.partialorder %v436, 0.0
      %vm471 = vcmp.gt.f32.partialorder %v441, 0.0
      %vm472 = vcmp.gt.f32.partialorder %v446, 0.0
      %vm473 = vcmp.gt.f32.partialorder %v451, 0.0
      %vm474 = vcmp.gt.f32.partialorder %v456, 0.0
      %v475 = vmin.f32 %v381, 0.0
      %v476 = vmin.f32 %v386, 0.0
      %v477 = vmin.f32 %v391, 0.0
      %v478 = vmin.f32 %v396, 0.0
      %v479 = vmin.f32 %v401, 0.0
      %v480 = vmin.f32 %v406, 0.0
      %v481 = vmin.f32 %v411, 0.0
      %v482 = vmin.f32 %v416, 0.0
      %v483 = vmin.f32 %v421, 0.0
      %v484 = vmin.f32 %v426, 0.0
      %v485 = vmin.f32 %v431, 0.0
      %v486 = vmin.f32 %v436, 0.0
      %v487 = vmin.f32 %v441, 0.0
      %v488 = vmin.f32 %v446, 0.0
      %v489 = vmin.f32 %v451, 0.0
      %v490 = vmin.f32 %v456, 0.0
      %v491 = vmul.f32 %v475, 1.442695
      %v492 = vpow.pop %v491
      %v493 = vmul.f32 %v476, 1.442695
      %v494 = vpow.pop %v493
      %v495 = vmul.f32 %v477, 1.442695
      %v496 = vpow.pop %v495
      %v497 = vmul.f32 %v478, 1.442695
      %v498 = vpow.pop %v497
      %v499 = vmul.f32 %v479, 1.442695
      %v500 = vpow.pop %v499
      %v501 = vmul.f32 %v480, 1.442695
      %v502 = vpow.pop %v501
      %v503 = vmul.f32 %v481, 1.442695
      %v504 = vpow.pop %v503
      %v505 = vmul.f32 %v482, 1.442695
      %v506 = vpow.pop %v505
      %v507 = vmul.f32 %v483, 1.442695
      %v508 = vpow.pop %v507
      %v509 = vmul.f32 %v484, 1.442695
      %v510 = vpow.pop %v509
      %v511 = vmul.f32 %v485, 1.442695
      %v512 = vpow.pop %v511
      %v513 = vmul.f32 %v486, 1.442695
      %v514 = vpow.pop %v513
      %v515 = vmul.f32 %v487, 1.442695
      %v516 = vpow.pop %v515
      %v517 = vmul.f32 %v488, 1.442695
      %v518 = vpow.pop %v517
      %v519 = vmul.f32 %v489, 1.442695
      %v520 = vpow.pop %v519
      %v521 = vmul.f32 %v490, 1.442695
      %v522 = vpow.pop %v521
      %v523 = vsub.f32 %v492, 1.0
      %v524 = vsub.f32 %v494, 1.0
      %v525 = vsub.f32 %v496, 1.0
      %v526 = vsub.f32 %v498, 1.0
      %v527 = vsub.f32 %v500, 1.0
      %v528 = vsub.f32 %v502, 1.0
      %v529 = vsub.f32 %v504, 1.0
      %v530 = vsub.f32 %v506, 1.0
      %v531 = vsub.f32 %v508, 1.0
      %v532 = vsub.f32 %v510, 1.0
      %v533 = vsub.f32 %v512, 1.0
      %v534 = vsub.f32 %v514, 1.0
      %v535 = vsub.f32 %v516, 1.0
      %v536 = vsub.f32 %v518, 1.0
      %v537 = vsub.f32 %v520, 1.0
      %v538 = vsub.f32 %v522, 1.0
      %v539 = vsel %vm459, %v381, %v523
      %v540 = vsel %vm460, %v386, %v524
      %v541 = vsel %vm461, %v391, %v525
      %v542 = vsel %vm462, %v396, %v526
      %v543 = vsel %vm463, %v401, %v527
      %v544 = vsel %vm464, %v406, %v528
      %v545 = vsel %vm465, %v411, %v529
      %v546 = vsel %vm466, %v416, %v530
      %v547 = vsel %vm467, %v421, %v531
      %v548 = vsel %vm468, %v426, %v532
      %v549 = vsel %vm469, %v431, %v533
      %v550 = vsel %vm470, %v436, %v534
      %v551 = vsel %vm471, %v441, %v535
      %v552 = vsel %vm472, %v446, %v536
      %v553 = vsel %vm473, %v451, %v537
      %v554 = vsel %vm474, %v456, %v538
      %555 = vadd.xlane.f32.xlu0 %v539
      %v556 = vpop.xlane.xlu0 %555
      %557 = vadd.xlane.f32.xlu0 %v540
      %v558 = vpop.xlane.xlu0 %557
      %559 = vadd.xlane.f32.xlu0 %v541
      %v560 = vpop.xlane.xlu0 %559
      %561 = vadd.xlane.f32.xlu0 %v542
      %v562 = vpop.xlane.xlu0 %561
      %563 = vadd.xlane.f32.xlu0 %v543
      %v564 = vpop.xlane.xlu0 %563
      %565 = vadd.xlane.f32.xlu0 %v544
      %v566 = vpop.xlane.xlu0 %565
      %567 = vadd.xlane.f32.xlu0 %v545
      %v568 = vpop.xlane.xlu0 %567
      %569 = vadd.xlane.f32.xlu0 %v546
      %v570 = vpop.xlane.xlu0 %569
      %571 = vadd.xlane.f32.xlu0 %v547
      %v572 = vpop.xlane.xlu0 %571
      %573 = vadd.xlane.f32.xlu0 %v548
      %v574 = vpop.xlane.xlu0 %573
      %575 = vadd.xlane.f32.xlu0 %v549
      %v576 = vpop.xlane.xlu0 %575
      %577 = vadd.xlane.f32.xlu0 %v550
      %v578 = vpop.xlane.xlu0 %577
      %579 = vadd.xlane.f32.xlu0 %v551
      %v580 = vpop.xlane.xlu0 %579
      %581 = vadd.xlane.f32.xlu0 %v552
      %v582 = vpop.xlane.xlu0 %581
      %583 = vadd.xlane.f32.xlu0 %v553
      %v584 = vpop.xlane.xlu0 %583
      %585 = vadd.xlane.f32.xlu0 %v554
      %v586 = vpop.xlane.xlu0 %585
      %v587 = vmul.f32 %v556, 0.015625
      %v588 = vmul.f32 %v558, 0.015625
      %v589 = vmul.f32 %v560, 0.015625
      %v590 = vmul.f32 %v562, 0.015625
      %v591 = vmul.f32 %v564, 0.015625
      %v592 = vmul.f32 %v566, 0.015625
      %v593 = vmul.f32 %v568, 0.015625
      %v594 = vmul.f32 %v570, 0.015625
      %v595 = vmul.f32 %v572, 0.015625
      %v596 = vmul.f32 %v574, 0.015625
      %v597 = vmul.f32 %v576, 0.015625
      %v598 = vmul.f32 %v578, 0.015625
      %v599 = vmul.f32 %v580, 0.015625
      %v600 = vmul.f32 %v582, 0.015625
      %v601 = vmul.f32 %v584, 0.015625
      %v602 = vmul.f32 %v586, 0.015625
      %v603 = vsub.f32 %v539, %v587
      %v604 = vsub.f32 %v540, %v588
      %v605 = vsub.f32 %v541, %v589
      %v606 = vsub.f32 %v542, %v590
      %v607 = vsub.f32 %v543, %v591
      %v608 = vsub.f32 %v544, %v592
      %v609 = vsub.f32 %v545, %v593
      %v610 = vsub.f32 %v546, %v594
      %v611 = vsub.f32 %v547, %v595
      %v612 = vsub.f32 %v548, %v596
      %v613 = vsub.f32 %v549, %v597
      %v614 = vsub.f32 %v550, %v598
      %v615 = vsub.f32 %v551, %v599
      %v616 = vsub.f32 %v552, %v600
      %v617 = vsub.f32 %v553, %v601
      %v618 = vsub.f32 %v554, %v602
      %v619 = vlaneseq
      %v620 = vand.u32 %v619, 127
      %vm621 = vcmp.lt.s32.totalorder %v620, 64
      %v622 = vsel %vm621, 1, 0
      %v623 = vcvt.s32.f32 %v622
      %v624 = vmul.f32 %v603, %v623
      %v625 = vmul.f32 %v604, %v623
      %v626 = vmul.f32 %v605, %v623
      %v627 = vmul.f32 %v606, %v623
      %v628 = vmul.f32 %v607, %v623
      %v629 = vmul.f32 %v608, %v623
      %v630 = vmul.f32 %v609, %v623
      %v631 = vmul.f32 %v610, %v623
      %v632 = vmul.f32 %v611, %v623
      %v633 = vmul.f32 %v612, %v623
      %v634 = vmul.f32 %v613, %v623
      %v635 = vmul.f32 %v614, %v623
      %v636 = vmul.f32 %v615, %v623
      %v637 = vmul.f32 %v616, %v623
      %v638 = vmul.f32 %v617, %v623
      %v639 = vmul.f32 %v618, %v623
      %v640 = vmul.f32 %v624, %v624
      %v641 = vmul.f32 %v625, %v625
      %v642 = vmul.f32 %v626, %v626
      %v643 = vmul.f32 %v627, %v627
      %v644 = vmul.f32 %v628, %v628
      %v645 = vmul.f32 %v629, %v629
      %v646 = vmul.f32 %v630, %v630
      %v647 = vmul.f32 %v631, %v631
      %v648 = vmul.f32 %v632, %v632
      %v649 = vmul.f32 %v633, %v633
      %v650 = vmul.f32 %v634, %v634
      %v651 = vmul.f32 %v635, %v635
      %v652 = vmul.f32 %v636, %v636
      %v653 = vmul.f32 %v637, %v637
      %v654 = vmul.f32 %v638, %v638
      %v655 = vmul.f32 %v639, %v639
      %656 = vadd.xlane.f32.xlu0 %v640
      %v657 = vpop.xlane.xlu0 %656
      %658 = vadd.xlane.f32.xlu0 %v641
      %v659 = vpop.xlane.xlu0 %658
      %660 = vadd.xlane.f32.xlu0 %v642
      %v661 = vpop.xlane.xlu0 %660
      %662 = vadd.xlane.f32.xlu0 %v643
      %v663 = vpop.xlane.xlu0 %662
      %664 = vadd.xlane.f32.xlu0 %v644
      %v665 = vpop.xlane.xlu0 %664
      %666 = vadd.xlane.f32.xlu0 %v645
      %v667 = vpop.xlane.xlu0 %666
      %668 = vadd.xlane.f32.xlu0 %v646
      %v669 = vpop.xlane.xlu0 %668
      %670 = vadd.xlane.f32.xlu0 %v647
      %v671 = vpop.xlane.xlu0 %670
      %672 = vadd.xlane.f32.xlu0 %v648
      %v673 = vpop.xlane.xlu0 %672
      %674 = vadd.xlane.f32.xlu0 %v649
      %v675 = vpop.xlane.xlu0 %674
      %676 = vadd.xlane.f32.xlu0 %v650
      %v677 = vpop.xlane.xlu0 %676
      %678 = vadd.xlane.f32.xlu0 %v651
      %v679 = vpop.xlane.xlu0 %678
      %680 = vadd.xlane.f32.xlu0 %v652
      %v681 = vpop.xlane.xlu0 %680
      %682 = vadd.xlane.f32.xlu0 %v653
      %v683 = vpop.xlane.xlu0 %682
      %684 = vadd.xlane.f32.xlu0 %v654
      %v685 = vpop.xlane.xlu0 %684
      %686 = vadd.xlane.f32.xlu0 %v655
      %v687 = vpop.xlane.xlu0 %686
      %v688 = vmul.f32 %v657, 0.015625
      %v689 = vmul.f32 %v659, 0.015625
      %v690 = vmul.f32 %v661, 0.015625
      %v691 = vmul.f32 %v663, 0.015625
      %v692 = vmul.f32 %v665, 0.015625
      %v693 = vmul.f32 %v667, 0.015625
      %v694 = vmul.f32 %v669, 0.015625
      %v695 = vmul.f32 %v671, 0.015625
      %v696 = vmul.f32 %v673, 0.015625
      %v697 = vmul.f32 %v675, 0.015625
      %v698 = vmul.f32 %v677, 0.015625
      %v699 = vmul.f32 %v679, 0.015625
      %v700 = vmul.f32 %v681, 0.015625
      %v701 = vmul.f32 %v683, 0.015625
      %v702 = vmul.f32 %v685, 0.015625
      %v703 = vmul.f32 %v687, 0.015625
      %v704 = vadd.f32 %v688, 1e-05
      %v705 = vadd.f32 %v689, 1e-05
      %v706 = vadd.f32 %v690, 1e-05
      %v707 = vadd.f32 %v691, 1e-05
      %v708 = vadd.f32 %v692, 1e-05
      %v709 = vadd.f32 %v693, 1e-05
      %v710 = vadd.f32 %v694, 1e-05
      %v711 = vadd.f32 %v695, 1e-05
      %v712 = vadd.f32 %v696, 1e-05
      %v713 = vadd.f32 %v697, 1e-05
      %v714 = vadd.f32 %v698, 1e-05
      %v715 = vadd.f32 %v699, 1e-05
      %v716 = vadd.f32 %v700, 1e-05
      %v717 = vadd.f32 %v701, 1e-05
      %v718 = vadd.f32 %v702, 1e-05
      %v719 = vadd.f32 %v703, 1e-05
      %v720 = vrsqrt.pop %v704
      %v721 = vrsqrt.pop %v705
      %v722 = vrsqrt.pop %v706
      %v723 = vrsqrt.pop %v707
      %v724 = vrsqrt.pop %v708
      %v725 = vrsqrt.pop %v709
      %v726 = vrsqrt.pop %v710
      %v727 = vrsqrt.pop %v711
      %v728 = vrsqrt.pop %v712
      %v729 = vrsqrt.pop %v713
      %v730 = vrsqrt.pop %v714
      %v731 = vrsqrt.pop %v715
      %v732 = vrsqrt.pop %v716
      %v733 = vrsqrt.pop %v717
      %v734 = vrsqrt.pop %v718
      %v735 = vrsqrt.pop %v719
      %v736 = vmul.f32 %v624, %v720
      %v737 = vmul.f32 %v625, %v721
      %v738 = vmul.f32 %v626, %v722
      %v739 = vmul.f32 %v627, %v723
      %v740 = vmul.f32 %v628, %v724
      %v741 = vmul.f32 %v629, %v725
      %v742 = vmul.f32 %v630, %v726
      %v743 = vmul.f32 %v631, %v727
      %v744 = vmul.f32 %v632, %v728
      %v745 = vmul.f32 %v633, %v729
      %v746 = vmul.f32 %v634, %v730
      %v747 = vmul.f32 %v635, %v731
      %v748 = vmul.f32 %v636, %v732
      %v749 = vmul.f32 %v637, %v733
      %v750 = vmul.f32 %v638, %v734
      %v751 = vmul.f32 %v639, %v735
      %v752 = vlaneseq
      %v753 = vshrl.u32 %v752, 7
      %v754 = vsub.s32 1, %v753
      %v755 = vrot.slane %v277, %v754
      %v756 = vmul.f32 %v736, %v755
      %v757 = vmul.f32 %v737, %v755
      %v758 = vmul.f32 %v738, %v755
      %v759 = vmul.f32 %v739, %v755
      %v760 = vmul.f32 %v740, %v755
      %v761 = vmul.f32 %v741, %v755
      %v762 = vmul.f32 %v742, %v755
      %v763 = vmul.f32 %v743, %v755
      %v764 = vmul.f32 %v744, %v755
      %v765 = vmul.f32 %v745, %v755
      %v766 = vmul.f32 %v746, %v755
      %v767 = vmul.f32 %v747, %v755
      %v768 = vmul.f32 %v748, %v755
      %v769 = vmul.f32 %v749, %v755
      %v770 = vmul.f32 %v750, %v755
      %v771 = vmul.f32 %v751, %v755
      %v772 = vlaneseq
      %v773 = vshrl.u32 %v772, 7
      %v774 = vsub.s32 2, %v773
      %v775 = vrot.slane %v277, %v774
      %v776 = vadd.f32 %v756, %v775
      %v777 = vadd.f32 %v757, %v775
      %v778 = vadd.f32 %v758, %v775
      %v779 = vadd.f32 %v759, %v775
      %v780 = vadd.f32 %v760, %v775
      %v781 = vadd.f32 %v761, %v775
      %v782 = vadd.f32 %v762, %v775
      %v783 = vadd.f32 %v763, %v775
      %v784 = vadd.f32 %v764, %v775
      %v785 = vadd.f32 %v765, %v775
      %v786 = vadd.f32 %v766, %v775
      %v787 = vadd.f32 %v767, %v775
      %v788 = vadd.f32 %v768, %v775
      %v789 = vadd.f32 %v769, %v775
      %v790 = vadd.f32 %v770, %v775
      %v791 = vadd.f32 %v771, %v775
      %v792 = vld [vmem:[%s3] sm:$0xff]
      %v793 = vld [vmem:[%s3 + $0x8] sm:$0xff]
      %v794 = vld [vmem:[%s3 + $0x10] sm:$0xff]
      %v795 = vld [vmem:[%s3 + $0x18] sm:$0xff]
      %v796 = vld [vmem:[%s3 + $0x20] sm:$0xff]
      %v797 = vld [vmem:[%s3 + $0x28] sm:$0xff]
      %v798 = vld [vmem:[%s3 + $0x30] sm:$0xff]
      %v799 = vld [vmem:[%s3 + $0x38] sm:$0xff]
      %v800 = vld [vmem:[%s3 + $0x40] sm:$0xff]
      %v801 = vld [vmem:[%s3 + $0x48] sm:$0xff]
      %v802 = vld [vmem:[%s3 + $0x50] sm:$0xff]
      %v803 = vld [vmem:[%s3 + $0x58] sm:$0xff]
      %v804 = vld [vmem:[%s3 + $0x60] sm:$0xff]
      %v805 = vld [vmem:[%s3 + $0x68] sm:$0xff]
      %v806 = vld [vmem:[%s3 + $0x70] sm:$0xff]
      %v807 = vld [vmem:[%s3 + $0x78] sm:$0xff]
      %v808 = vlaneseq
      %v809 = vshrl.u32 %v808, 7
      %v810 = vsub.s32 3, %v809
      %v811 = vrot.slane %v277, %v810
      %812 = vmatprep.subr.mxu0 0.0
      %813 = vmatpush1.msra.mxu0 %v807
      %814 = vmatprep.subr.mxu0 0.0
      %815 = vmatpush1.msra.mxu0 %v806
      %816 = vmatprep.subr.mxu0 0.0
      %817 = vmatpush1.msra.mxu0 %v805
      %818 = vmatprep.subr.mxu0 0.0
      %819 = vmatpush1.msra.mxu0 %v804
      %820 = vmatprep.subr.mxu0 0.0
      %821 = vmatpush1.msra.mxu0 %v803
      %822 = vmatprep.subr.mxu0 0.0
      %823 = vmatpush1.msra.mxu0 %v802
      %824 = vmatprep.subr.mxu0 0.0
      %825 = vmatpush1.msra.mxu0 %v801
      %826 = vmatprep.subr.mxu0 0.0
      %827 = vmatpush1.msra.mxu0 %v800
      %828 = vmatprep.subr.mxu0 0.0
      %829 = vmatpush1.msra.mxu0 %v799
      %830 = vmatprep.subr.mxu0 0.0
      %831 = vmatpush1.msra.mxu0 %v798
      %832 = vmatprep.subr.mxu0 0.0
      %833 = vmatpush1.msra.mxu0 %v797
      %834 = vmatprep.subr.mxu0 0.0
      %835 = vmatpush1.msra.mxu0 %v796
      %836 = vmatprep.subr.mxu0 0.0
      %837 = vmatpush1.msra.mxu0 %v795
      %838 = vmatprep.subr.mxu0 0.0
      %839 = vmatpush1.msra.mxu0 %v794
      %840 = vmatprep.subr.mxu0 0.0
      %841 = vmatpush1.msra.mxu0 %v793
      %842 = vmatprep.subr.mxu0 0.0
      %843 = vmatpush1.msra.mxu0 %v792
      %844 = vmatprep.subr.mxu0 0.0
      %845 = vmatpush2.msra.mxu0 0.0
      %846 = vmatprep.subr.mxu0 0.0
      %847 = vmatpush2.msra.mxu0 0.0
      %848 = vmatprep.subr.mxu0 0.0
      %849 = vmatpush2.msra.mxu0 0.0
      %850 = vmatprep.subr.mxu0 0.0
      %851 = vmatpush2.msra.mxu0 0.0
      %852 = vmatprep.subr.mxu0 0.0
      %853 = vmatpush2.msra.mxu0 0.0
      %854 = vmatprep.subr.mxu0 0.0
      %855 = vmatpush2.msra.mxu0 0.0
      %856 = vmatprep.subr.mxu0 0.0
      %857 = vmatpush2.msra.mxu0 0.0
      %858 = vmatprep.subr.mxu0 0.0
      %859 = vmatpush2.msra.mxu0 0.0
      %860 = vmatprep.subr.mxu0 0.0
      %861 = vmatpush2.msra.mxu0 0.0
      %862 = vmatprep.subr.mxu0 0.0
      %863 = vmatpush2.msra.mxu0 0.0
      %864 = vmatprep.subr.mxu0 0.0
      %865 = vmatpush2.msra.mxu0 0.0
      %866 = vmatprep.subr.mxu0 0.0
      %867 = vmatpush2.msra.mxu0 0.0
      %868 = vmatprep.subr.mxu0 0.0
      %869 = vmatpush2.msra.mxu0 0.0
      %870 = vmatprep.subr.mxu0 0.0
      %871 = vmatpush2.msra.mxu0 0.0
      %872 = vmatprep.subr.mxu0 0.0
      %873 = vmatpush2.msra.mxu0 0.0
      %874 = vmatprep.subr.mxu0 0.0
      %875 = vmatpush2.msra.mxu0 0.0
      %876 = vmatprep.mubr.f32.mxu0 0.0
      %877 = vmatmul.mubr.f32.gmra.mxu0 %v776
      %v878 = vpop.f32.mrf.mxu0
      %v879 = vadd.f32 %v811, %v878
      %v880 = vpop.f32.mrf.mxu0
      %881 = vmatprep.mubr.f32.mxu0 0.0
      %882 = vmatmul.mubr.f32.gmra.mxu0 %v777
      %v883 = vpop.f32.mrf.mxu0
      %v884 = vadd.f32 %v811, %v883
      %v885 = vpop.f32.mrf.mxu0
      %886 = vmatprep.mubr.f32.mxu0 0.0
      %887 = vmatmul.mubr.f32.gmra.mxu0 %v778
      %v888 = vpop.f32.mrf.mxu0
      %v889 = vadd.f32 %v811, %v888
      %v890 = vpop.f32.mrf.mxu0
      %891 = vmatprep.mubr.f32.mxu0 0.0
      %892 = vmatmul.mubr.f32.gmra.mxu0 %v779
      %v893 = vpop.f32.mrf.mxu0
      %v894 = vadd.f32 %v811, %v893
      %v895 = vpop.f32.mrf.mxu0
      %896 = vmatprep.mubr.f32.mxu0 0.0
      %897 = vmatmul.mubr.f32.gmra.mxu0 %v780
      %v898 = vpop.f32.mrf.mxu0
      %v899 = vadd.f32 %v811, %v898
      %v900 = vpop.f32.mrf.mxu0
      %901 = vmatprep.mubr.f32.mxu0 0.0
      %902 = vmatmul.mubr.f32.gmra.mxu0 %v781
      %v903 = vpop.f32.mrf.mxu0
      %v904 = vadd.f32 %v811, %v903
      %v905 = vpop.f32.mrf.mxu0
      %906 = vmatprep.mubr.f32.mxu0 0.0
      %907 = vmatmul.mubr.f32.gmra.mxu0 %v782
      %v908 = vpop.f32.mrf.mxu0
      %v909 = vadd.f32 %v811, %v908
      %v910 = vpop.f32.mrf.mxu0
      %911 = vmatprep.mubr.f32.mxu0 0.0
      %912 = vmatmul.mubr.f32.gmra.mxu0 %v783
      %v913 = vpop.f32.mrf.mxu0
      %v914 = vadd.f32 %v811, %v913
      %v915 = vpop.f32.mrf.mxu0
      %916 = vmatprep.mubr.f32.mxu0 0.0
      %917 = vmatmul.mubr.f32.gmra.mxu0 %v784
      %v918 = vpop.f32.mrf.mxu0
      %v919 = vadd.f32 %v811, %v918
      %v920 = vpop.f32.mrf.mxu0
      %921 = vmatprep.mubr.f32.mxu0 0.0
      %922 = vmatmul.mubr.f32.gmra.mxu0 %v785
      %v923 = vpop.f32.mrf.mxu0
      %v924 = vadd.f32 %v811, %v923
      %v925 = vpop.f32.mrf.mxu0
      %926 = vmatprep.mubr.f32.mxu0 0.0
      %927 = vmatmul.mubr.f32.gmra.mxu0 %v786
      %v928 = vpop.f32.mrf.mxu0
      %v929 = vadd.f32 %v811, %v928
      %v930 = vpop.f32.mrf.mxu0
      %931 = vmatprep.mubr.f32.mxu0 0.0
      %932 = vmatmul.mubr.f32.gmra.mxu0 %v787
      %v933 = vpop.f32.mrf.mxu0
      %v934 = vadd.f32 %v811, %v933
      %v935 = vpop.f32.mrf.mxu0
      %936 = vmatprep.mubr.f32.mxu0 0.0
      %937 = vmatmul.mubr.f32.gmra.mxu0 %v788
      %v938 = vpop.f32.mrf.mxu0
      %v939 = vadd.f32 %v811, %v938
      %v940 = vpop.f32.mrf.mxu0
      %941 = vmatprep.mubr.f32.mxu0 0.0
      %942 = vmatmul.mubr.f32.gmra.mxu0 %v789
      %v943 = vpop.f32.mrf.mxu0
      %v944 = vadd.f32 %v811, %v943
      %v945 = vpop.f32.mrf.mxu0
      %946 = vmatprep.mubr.f32.mxu0 0.0
      %947 = vmatmul.mubr.f32.gmra.mxu0 %v790
      %v948 = vpop.f32.mrf.mxu0
      %v949 = vadd.f32 %v811, %v948
      %v950 = vpop.f32.mrf.mxu0
      %951 = vmatprep.mubr.f32.mxu0 0.0
      %952 = vmatmul.mubr.f32.gmra.mxu0 %v791
      %v953 = vpop.f32.mrf.mxu0
      %v954 = vadd.f32 %v811, %v953
      %v955 = vpop.f32.mrf.mxu0
      %956 = vdwg.mxu0
      %vm957 = vcmp.gt.f32.partialorder %v879, 0.0
      %vm958 = vcmp.gt.f32.partialorder %v884, 0.0
      %vm959 = vcmp.gt.f32.partialorder %v889, 0.0
      %vm960 = vcmp.gt.f32.partialorder %v894, 0.0
      %vm961 = vcmp.gt.f32.partialorder %v899, 0.0
      %vm962 = vcmp.gt.f32.partialorder %v904, 0.0
      %vm963 = vcmp.gt.f32.partialorder %v909, 0.0
      %vm964 = vcmp.gt.f32.partialorder %v914, 0.0
      %vm965 = vcmp.gt.f32.partialorder %v919, 0.0
      %vm966 = vcmp.gt.f32.partialorder %v924, 0.0
      %vm967 = vcmp.gt.f32.partialorder %v929, 0.0
      %vm968 = vcmp.gt.f32.partialorder %v934, 0.0
      %vm969 = vcmp.gt.f32.partialorder %v939, 0.0
      %vm970 = vcmp.gt.f32.partialorder %v944, 0.0
      %vm971 = vcmp.gt.f32.partialorder %v949, 0.0
      %vm972 = vcmp.gt.f32.partialorder %v954, 0.0
      %v973 = vmin.f32 %v879, 0.0
      %v974 = vmin.f32 %v884, 0.0
      %v975 = vmin.f32 %v889, 0.0
      %v976 = vmin.f32 %v894, 0.0
      %v977 = vmin.f32 %v899, 0.0
      %v978 = vmin.f32 %v904, 0.0
      %v979 = vmin.f32 %v909, 0.0
      %v980 = vmin.f32 %v914, 0.0
      %v981 = vmin.f32 %v919, 0.0
      %v982 = vmin.f32 %v924, 0.0
      %v983 = vmin.f32 %v929, 0.0
      %v984 = vmin.f32 %v934, 0.0
      %v985 = vmin.f32 %v939, 0.0
      %v986 = vmin.f32 %v944, 0.0
      %v987 = vmin.f32 %v949, 0.0
      %v988 = vmin.f32 %v954, 0.0
      %v989 = vmul.f32 %v973, 1.442695
      %v990 = vpow.pop %v989
      %v991 = vmul.f32 %v974, 1.442695
      %v992 = vpow.pop %v991
      %v993 = vmul.f32 %v975, 1.442695
      %v994 = vpow.pop %v993
      %v995 = vmul.f32 %v976, 1.442695
      %v996 = vpow.pop %v995
      %v997 = vmul.f32 %v977, 1.442695
      %v998 = vpow.pop %v997
      %v999 = vmul.f32 %v978, 1.442695
      %v1000 = vpow.pop %v999
      %v1001 = vmul.f32 %v979, 1.442695
      %v1002 = vpow.pop %v1001
      %v1003 = vmul.f32 %v980, 1.442695
      %v1004 = vpow.pop %v1003
      %v1005 = vmul.f32 %v981, 1.442695
      %v1006 = vpow.pop %v1005
      %v1007 = vmul.f32 %v982, 1.442695
      %v1008 = vpow.pop %v1007
      %v1009 = vmul.f32 %v983, 1.442695
      %v1010 = vpow.pop %v1009
      %v1011 = vmul.f32 %v984, 1.442695
      %v1012 = vpow.pop %v1011
      %v1013 = vmul.f32 %v985, 1.442695
      %v1014 = vpow.pop %v1013
      %v1015 = vmul.f32 %v986, 1.442695
      %v1016 = vpow.pop %v1015
      %v1017 = vmul.f32 %v987, 1.442695
      %v1018 = vpow.pop %v1017
      %v1019 = vmul.f32 %v988, 1.442695
      %v1020 = vpow.pop %v1019
      %v1021 = vsub.f32 %v990, 1.0
      %v1022 = vsub.f32 %v992, 1.0
      %v1023 = vsub.f32 %v994, 1.0
      %v1024 = vsub.f32 %v996, 1.0
      %v1025 = vsub.f32 %v998, 1.0
      %v1026 = vsub.f32 %v1000, 1.0
      %v1027 = vsub.f32 %v1002, 1.0
      %v1028 = vsub.f32 %v1004, 1.0
      %v1029 = vsub.f32 %v1006, 1.0
      %v1030 = vsub.f32 %v1008, 1.0
      %v1031 = vsub.f32 %v1010, 1.0
      %v1032 = vsub.f32 %v1012, 1.0
      %v1033 = vsub.f32 %v1014, 1.0
      %v1034 = vsub.f32 %v1016, 1.0
      %v1035 = vsub.f32 %v1018, 1.0
      %v1036 = vsub.f32 %v1020, 1.0
      %v1037 = vsel %vm957, %v879, %v1021
      %v1038 = vsel %vm958, %v884, %v1022
      %v1039 = vsel %vm959, %v889, %v1023
      %v1040 = vsel %vm960, %v894, %v1024
      %v1041 = vsel %vm961, %v899, %v1025
      %v1042 = vsel %vm962, %v904, %v1026
      %v1043 = vsel %vm963, %v909, %v1027
      %v1044 = vsel %vm964, %v914, %v1028
      %v1045 = vsel %vm965, %v919, %v1029
      %v1046 = vsel %vm966, %v924, %v1030
      %v1047 = vsel %vm967, %v929, %v1031
      %v1048 = vsel %vm968, %v934, %v1032
      %v1049 = vsel %vm969, %v939, %v1033
      %v1050 = vsel %vm970, %v944, %v1034
      %v1051 = vsel %vm971, %v949, %v1035
      %v1052 = vsel %vm972, %v954, %v1036
      %1053 = vadd.xlane.f32.xlu0 %v1037
      %v1054 = vpop.xlane.xlu0 %1053
      %1055 = vadd.xlane.f32.xlu0 %v1038
      %v1056 = vpop.xlane.xlu0 %1055
      %1057 = vadd.xlane.f32.xlu0 %v1039
      %v1058 = vpop.xlane.xlu0 %1057
      %1059 = vadd.xlane.f32.xlu0 %v1040
      %v1060 = vpop.xlane.xlu0 %1059
      %1061 = vadd.xlane.f32.xlu0 %v1041
      %v1062 = vpop.xlane.xlu0 %1061
      %1063 = vadd.xlane.f32.xlu0 %v1042
      %v1064 = vpop.xlane.xlu0 %1063
      %1065 = vadd.xlane.f32.xlu0 %v1043
      %v1066 = vpop.xlane.xlu0 %1065
      %1067 = vadd.xlane.f32.xlu0 %v1044
      %v1068 = vpop.xlane.xlu0 %1067
      %1069 = vadd.xlane.f32.xlu0 %v1045
      %v1070 = vpop.xlane.xlu0 %1069
      %1071 = vadd.xlane.f32.xlu0 %v1046
      %v1072 = vpop.xlane.xlu0 %1071
      %1073 = vadd.xlane.f32.xlu0 %v1047
      %v1074 = vpop.xlane.xlu0 %1073
      %1075 = vadd.xlane.f32.xlu0 %v1048
      %v1076 = vpop.xlane.xlu0 %1075
      %1077 = vadd.xlane.f32.xlu0 %v1049
      %v1078 = vpop.xlane.xlu0 %1077
      %1079 = vadd.xlane.f32.xlu0 %v1050
      %v1080 = vpop.xlane.xlu0 %1079
      %1081 = vadd.xlane.f32.xlu0 %v1051
      %v1082 = vpop.xlane.xlu0 %1081
      %1083 = vadd.xlane.f32.xlu0 %v1052
      %v1084 = vpop.xlane.xlu0 %1083
      %v1085 = vmul.f32 %v1054, 0.015625
      %v1086 = vmul.f32 %v1056, 0.015625
      %v1087 = vmul.f32 %v1058, 0.015625
      %v1088 = vmul.f32 %v1060, 0.015625
      %v1089 = vmul.f32 %v1062, 0.015625
      %v1090 = vmul.f32 %v1064, 0.015625
      %v1091 = vmul.f32 %v1066, 0.015625
      %v1092 = vmul.f32 %v1068, 0.015625
      %v1093 = vmul.f32 %v1070, 0.015625
      %v1094 = vmul.f32 %v1072, 0.015625
      %v1095 = vmul.f32 %v1074, 0.015625
      %v1096 = vmul.f32 %v1076, 0.015625
      %v1097 = vmul.f32 %v1078, 0.015625
      %v1098 = vmul.f32 %v1080, 0.015625
      %v1099 = vmul.f32 %v1082, 0.015625
      %v1100 = vmul.f32 %v1084, 0.015625
      %v1101 = vsub.f32 %v1037, %v1085
      %v1102 = vsub.f32 %v1038, %v1086
      %v1103 = vsub.f32 %v1039, %v1087
      %v1104 = vsub.f32 %v1040, %v1088
      %v1105 = vsub.f32 %v1041, %v1089
      %v1106 = vsub.f32 %v1042, %v1090
      %v1107 = vsub.f32 %v1043, %v1091
      %v1108 = vsub.f32 %v1044, %v1092
      %v1109 = vsub.f32 %v1045, %v1093
      %v1110 = vsub.f32 %v1046, %v1094
      %v1111 = vsub.f32 %v1047, %v1095
      %v1112 = vsub.f32 %v1048, %v1096
      %v1113 = vsub.f32 %v1049, %v1097
      %v1114 = vsub.f32 %v1050, %v1098
      %v1115 = vsub.f32 %v1051, %v1099
      %v1116 = vsub.f32 %v1052, %v1100
      %v1117 = vmul.f32 %v1101, %v623
      %v1118 = vmul.f32 %v1102, %v623
      %v1119 = vmul.f32 %v1103, %v623
      %v1120 = vmul.f32 %v1104, %v623
      %v1121 = vmul.f32 %v1105, %v623
      %v1122 = vmul.f32 %v1106, %v623
      %v1123 = vmul.f32 %v1107, %v623
      %v1124 = vmul.f32 %v1108, %v623
      %v1125 = vmul.f32 %v1109, %v623
      %v1126 = vmul.f32 %v1110, %v623
      %v1127 = vmul.f32 %v1111, %v623
      %v1128 = vmul.f32 %v1112, %v623
      %v1129 = vmul.f32 %v1113, %v623
      %v1130 = vmul.f32 %v1114, %v623
      %v1131 = vmul.f32 %v1115, %v623
      %v1132 = vmul.f32 %v1116, %v623
      %v1133 = vmul.f32 %v1117, %v1117
      %v1134 = vmul.f32 %v1118, %v1118
      %v1135 = vmul.f32 %v1119, %v1119
      %v1136 = vmul.f32 %v1120, %v1120
      %v1137 = vmul.f32 %v1121, %v1121
      %v1138 = vmul.f32 %v1122, %v1122
      %v1139 = vmul.f32 %v1123, %v1123
      %v1140 = vmul.f32 %v1124, %v1124
      %v1141 = vmul.f32 %v1125, %v1125
      %v1142 = vmul.f32 %v1126, %v1126
      %v1143 = vmul.f32 %v1127, %v1127
      %v1144 = vmul.f32 %v1128, %v1128
      %v1145 = vmul.f32 %v1129, %v1129
      %v1146 = vmul.f32 %v1130, %v1130
      %v1147 = vmul.f32 %v1131, %v1131
      %v1148 = vmul.f32 %v1132, %v1132
      %1149 = vadd.xlane.f32.xlu0 %v1133
      %v1150 = vpop.xlane.xlu0 %1149
      %1151 = vadd.xlane.f32.xlu0 %v1134
      %v1152 = vpop.xlane.xlu0 %1151
      %1153 = vadd.xlane.f32.xlu0 %v1135
      %v1154 = vpop.xlane.xlu0 %1153
      %1155 = vadd.xlane.f32.xlu0 %v1136
      %v1156 = vpop.xlane.xlu0 %1155
      %1157 = vadd.xlane.f32.xlu0 %v1137
      %v1158 = vpop.xlane.xlu0 %1157
      %1159 = vadd.xlane.f32.xlu0 %v1138
      %v1160 = vpop.xlane.xlu0 %1159
      %1161 = vadd.xlane.f32.xlu0 %v1139
      %v1162 = vpop.xlane.xlu0 %1161
      %1163 = vadd.xlane.f32.xlu0 %v1140
      %v1164 = vpop.xlane.xlu0 %1163
      %1165 = vadd.xlane.f32.xlu0 %v1141
      %v1166 = vpop.xlane.xlu0 %1165
      %1167 = vadd.xlane.f32.xlu0 %v1142
      %v1168 = vpop.xlane.xlu0 %1167
      %1169 = vadd.xlane.f32.xlu0 %v1143
      %v1170 = vpop.xlane.xlu0 %1169
      %1171 = vadd.xlane.f32.xlu0 %v1144
      %v1172 = vpop.xlane.xlu0 %1171
      %1173 = vadd.xlane.f32.xlu0 %v1145
      %v1174 = vpop.xlane.xlu0 %1173
      %1175 = vadd.xlane.f32.xlu0 %v1146
      %v1176 = vpop.xlane.xlu0 %1175
      %1177 = vadd.xlane.f32.xlu0 %v1147
      %v1178 = vpop.xlane.xlu0 %1177
      %1179 = vadd.xlane.f32.xlu0 %v1148
      %v1180 = vpop.xlane.xlu0 %1179
      %v1181 = vmul.f32 %v1150, 0.015625
      %v1182 = vmul.f32 %v1152, 0.015625
      %v1183 = vmul.f32 %v1154, 0.015625
      %v1184 = vmul.f32 %v1156, 0.015625
      %v1185 = vmul.f32 %v1158, 0.015625
      %v1186 = vmul.f32 %v1160, 0.015625
      %v1187 = vmul.f32 %v1162, 0.015625
      %v1188 = vmul.f32 %v1164, 0.015625
      %v1189 = vmul.f32 %v1166, 0.015625
      %v1190 = vmul.f32 %v1168, 0.015625
      %v1191 = vmul.f32 %v1170, 0.015625
      %v1192 = vmul.f32 %v1172, 0.015625
      %v1193 = vmul.f32 %v1174, 0.015625
      %v1194 = vmul.f32 %v1176, 0.015625
      %v1195 = vmul.f32 %v1178, 0.015625
      %v1196 = vmul.f32 %v1180, 0.015625
      %v1197 = vadd.f32 %v1181, 1e-05
      %v1198 = vadd.f32 %v1182, 1e-05
      %v1199 = vadd.f32 %v1183, 1e-05
      %v1200 = vadd.f32 %v1184, 1e-05
      %v1201 = vadd.f32 %v1185, 1e-05
      %v1202 = vadd.f32 %v1186, 1e-05
      %v1203 = vadd.f32 %v1187, 1e-05
      %v1204 = vadd.f32 %v1188, 1e-05
      %v1205 = vadd.f32 %v1189, 1e-05
      %v1206 = vadd.f32 %v1190, 1e-05
      %v1207 = vadd.f32 %v1191, 1e-05
      %v1208 = vadd.f32 %v1192, 1e-05
      %v1209 = vadd.f32 %v1193, 1e-05
      %v1210 = vadd.f32 %v1194, 1e-05
      %v1211 = vadd.f32 %v1195, 1e-05
      %v1212 = vadd.f32 %v1196, 1e-05
      %v1213 = vrsqrt.pop %v1197
      %v1214 = vrsqrt.pop %v1198
      %v1215 = vrsqrt.pop %v1199
      %v1216 = vrsqrt.pop %v1200
      %v1217 = vrsqrt.pop %v1201
      %v1218 = vrsqrt.pop %v1202
      %v1219 = vrsqrt.pop %v1203
      %v1220 = vrsqrt.pop %v1204
      %v1221 = vrsqrt.pop %v1205
      %v1222 = vrsqrt.pop %v1206
      %v1223 = vrsqrt.pop %v1207
      %v1224 = vrsqrt.pop %v1208
      %v1225 = vrsqrt.pop %v1209
      %v1226 = vrsqrt.pop %v1210
      %v1227 = vrsqrt.pop %v1211
      %v1228 = vrsqrt.pop %v1212
      %v1229 = vmul.f32 %v1117, %v1213
      %v1230 = vmul.f32 %v1118, %v1214
      %v1231 = vmul.f32 %v1119, %v1215
      %v1232 = vmul.f32 %v1120, %v1216
      %v1233 = vmul.f32 %v1121, %v1217
      %v1234 = vmul.f32 %v1122, %v1218
      %v1235 = vmul.f32 %v1123, %v1219
      %v1236 = vmul.f32 %v1124, %v1220
      %v1237 = vmul.f32 %v1125, %v1221
      %v1238 = vmul.f32 %v1126, %v1222
      %v1239 = vmul.f32 %v1127, %v1223
      %v1240 = vmul.f32 %v1128, %v1224
      %v1241 = vmul.f32 %v1129, %v1225
      %v1242 = vmul.f32 %v1130, %v1226
      %v1243 = vmul.f32 %v1131, %v1227
      %v1244 = vmul.f32 %v1132, %v1228
      %v1245 = vlaneseq
      %v1246 = vshrl.u32 %v1245, 7
      %v1247 = vsub.s32 4, %v1246
      %v1248 = vrot.slane %v277, %v1247
      %v1249 = vmul.f32 %v1229, %v1248
      %v1250 = vmul.f32 %v1230, %v1248
      %v1251 = vmul.f32 %v1231, %v1248
      %v1252 = vmul.f32 %v1232, %v1248
      %v1253 = vmul.f32 %v1233, %v1248
      %v1254 = vmul.f32 %v1234, %v1248
      %v1255 = vmul.f32 %v1235, %v1248
      %v1256 = vmul.f32 %v1236, %v1248
      %v1257 = vmul.f32 %v1237, %v1248
      %v1258 = vmul.f32 %v1238, %v1248
      %v1259 = vmul.f32 %v1239, %v1248
      %v1260 = vmul.f32 %v1240, %v1248
      %v1261 = vmul.f32 %v1241, %v1248
      %v1262 = vmul.f32 %v1242, %v1248
      %v1263 = vmul.f32 %v1243, %v1248
      %v1264 = vmul.f32 %v1244, %v1248
      %v1265 = vlaneseq
      %v1266 = vshrl.u32 %v1265, 7
      %v1267 = vsub.s32 5, %v1266
      %v1268 = vrot.slane %v277, %v1267
      %v1269 = vadd.f32 %v1249, %v1268
      %v1270 = vadd.f32 %v1250, %v1268
      %v1271 = vadd.f32 %v1251, %v1268
      %v1272 = vadd.f32 %v1252, %v1268
      %v1273 = vadd.f32 %v1253, %v1268
      %v1274 = vadd.f32 %v1254, %v1268
      %v1275 = vadd.f32 %v1255, %v1268
      %v1276 = vadd.f32 %v1256, %v1268
      %v1277 = vadd.f32 %v1257, %v1268
      %v1278 = vadd.f32 %v1258, %v1268
      %v1279 = vadd.f32 %v1259, %v1268
      %v1280 = vadd.f32 %v1260, %v1268
      %v1281 = vadd.f32 %v1261, %v1268
      %v1282 = vadd.f32 %v1262, %v1268
      %v1283 = vadd.f32 %v1263, %v1268
      %v1284 = vadd.f32 %v1264, %v1268
      %v1285 = vld [vmem:[%s4] sm:$0xff]
      %v1286 = vld [vmem:[%s4 + $0x8] sm:$0xff]
      %v1287 = vld [vmem:[%s4 + $0x10] sm:$0xff]
      %v1288 = vld [vmem:[%s4 + $0x18] sm:$0xff]
      %v1289 = vld [vmem:[%s4 + $0x20] sm:$0xff]
      %v1290 = vld [vmem:[%s4 + $0x28] sm:$0xff]
      %v1291 = vld [vmem:[%s4 + $0x30] sm:$0xff]
      %v1292 = vld [vmem:[%s4 + $0x38] sm:$0xff]
      %v1293 = vld [vmem:[%s4 + $0x40] sm:$0xff]
      %v1294 = vld [vmem:[%s4 + $0x48] sm:$0xff]
      %v1295 = vld [vmem:[%s4 + $0x50] sm:$0xff]
      %v1296 = vld [vmem:[%s4 + $0x58] sm:$0xff]
      %v1297 = vld [vmem:[%s4 + $0x60] sm:$0xff]
      %v1298 = vld [vmem:[%s4 + $0x68] sm:$0xff]
      %v1299 = vld [vmem:[%s4 + $0x70] sm:$0xff]
      %v1300 = vld [vmem:[%s4 + $0x78] sm:$0xff]
      %v1301 = vlaneseq
      %v1302 = vshrl.u32 %v1301, 7
      %v1303 = vsub.s32 6, %v1302
      %v1304 = vrot.slane %v277, %v1303
      %1305 = vmatprep.subr.mxu0 0.0
      %1306 = vmatpush1.msra.mxu0 %v1300
      %1307 = vmatprep.subr.mxu0 0.0
      %1308 = vmatpush1.msra.mxu0 %v1299
      %1309 = vmatprep.subr.mxu0 0.0
      %1310 = vmatpush1.msra.mxu0 %v1298
      %1311 = vmatprep.subr.mxu0 0.0
      %1312 = vmatpush1.msra.mxu0 %v1297
      %1313 = vmatprep.subr.mxu0 0.0
      %1314 = vmatpush1.msra.mxu0 %v1296
      %1315 = vmatprep.subr.mxu0 0.0
      %1316 = vmatpush1.msra.mxu0 %v1295
      %1317 = vmatprep.subr.mxu0 0.0
      %1318 = vmatpush1.msra.mxu0 %v1294
      %1319 = vmatprep.subr.mxu0 0.0
      %1320 = vmatpush1.msra.mxu0 %v1293
      %1321 = vmatprep.subr.mxu0 0.0
      %1322 = vmatpush1.msra.mxu0 %v1292
      %1323 = vmatprep.subr.mxu0 0.0
      %1324 = vmatpush1.msra.mxu0 %v1291
      %1325 = vmatprep.subr.mxu0 0.0
      %1326 = vmatpush1.msra.mxu0 %v1290
      %1327 = vmatprep.subr.mxu0 0.0
      %1328 = vmatpush1.msra.mxu0 %v1289
      %1329 = vmatprep.subr.mxu0 0.0
      %1330 = vmatpush1.msra.mxu0 %v1288
      %1331 = vmatprep.subr.mxu0 0.0
      %1332 = vmatpush1.msra.mxu0 %v1287
      %1333 = vmatprep.subr.mxu0 0.0
      %1334 = vmatpush1.msra.mxu0 %v1286
      %1335 = vmatprep.subr.mxu0 0.0
      %1336 = vmatpush1.msra.mxu0 %v1285
      %1337 = vmatprep.subr.mxu0 0.0
      %1338 = vmatpush2.msra.mxu0 0.0
      %1339 = vmatprep.subr.mxu0 0.0
      %1340 = vmatpush2.msra.mxu0 0.0
      %1341 = vmatprep.subr.mxu0 0.0
      %1342 = vmatpush2.msra.mxu0 0.0
      %1343 = vmatprep.subr.mxu0 0.0
      %1344 = vmatpush2.msra.mxu0 0.0
      %1345 = vmatprep.subr.mxu0 0.0
      %1346 = vmatpush2.msra.mxu0 0.0
      %1347 = vmatprep.subr.mxu0 0.0
      %1348 = vmatpush2.msra.mxu0 0.0
      %1349 = vmatprep.subr.mxu0 0.0
      %1350 = vmatpush2.msra.mxu0 0.0
      %1351 = vmatprep.subr.mxu0 0.0
      %1352 = vmatpush2.msra.mxu0 0.0
      %1353 = vmatprep.subr.mxu0 0.0
      %1354 = vmatpush2.msra.mxu0 0.0
      %1355 = vmatprep.subr.mxu0 0.0
      %1356 = vmatpush2.msra.mxu0 0.0
      %1357 = vmatprep.subr.mxu0 0.0
      %1358 = vmatpush2.msra.mxu0 0.0
      %1359 = vmatprep.subr.mxu0 0.0
      %1360 = vmatpush2.msra.mxu0 0.0
      %1361 = vmatprep.subr.mxu0 0.0
      %1362 = vmatpush2.msra.mxu0 0.0
      %1363 = vmatprep.subr.mxu0 0.0
      %1364 = vmatpush2.msra.mxu0 0.0
      %1365 = vmatprep.subr.mxu0 0.0
      %1366 = vmatpush2.msra.mxu0 0.0
      %1367 = vmatprep.subr.mxu0 0.0
      %1368 = vmatpush2.msra.mxu0 0.0
      %1369 = vmatprep.mubr.f32.mxu0 0.0
      %1370 = vmatmul.mubr.f32.gmra.mxu0 %v1269
      %v1371 = vpop.f32.mrf.mxu0
      %v1372 = vadd.f32 %v1304, %v1371
      %v1373 = vpop.f32.mrf.mxu0
      %1374 = vmatprep.mubr.f32.mxu0 0.0
      %1375 = vmatmul.mubr.f32.gmra.mxu0 %v1270
      %v1376 = vpop.f32.mrf.mxu0
      %v1377 = vadd.f32 %v1304, %v1376
      %v1378 = vpop.f32.mrf.mxu0
      %1379 = vmatprep.mubr.f32.mxu0 0.0
      %1380 = vmatmul.mubr.f32.gmra.mxu0 %v1271
      %v1381 = vpop.f32.mrf.mxu0
      %v1382 = vadd.f32 %v1304, %v1381
      %v1383 = vpop.f32.mrf.mxu0
      %1384 = vmatprep.mubr.f32.mxu0 0.0
      %1385 = vmatmul.mubr.f32.gmra.mxu0 %v1272
      %v1386 = vpop.f32.mrf.mxu0
      %v1387 = vadd.f32 %v1304, %v1386
      %v1388 = vpop.f32.mrf.mxu0
      %1389 = vmatprep.mubr.f32.mxu0 0.0
      %1390 = vmatmul.mubr.f32.gmra.mxu0 %v1273
      %v1391 = vpop.f32.mrf.mxu0
      %v1392 = vadd.f32 %v1304, %v1391
      %v1393 = vpop.f32.mrf.mxu0
      %1394 = vmatprep.mubr.f32.mxu0 0.0
      %1395 = vmatmul.mubr.f32.gmra.mxu0 %v1274
      %v1396 = vpop.f32.mrf.mxu0
      %v1397 = vadd.f32 %v1304, %v1396
      %v1398 = vpop.f32.mrf.mxu0
      %1399 = vmatprep.mubr.f32.mxu0 0.0
      %1400 = vmatmul.mubr.f32.gmra.mxu0 %v1275
      %v1401 = vpop.f32.mrf.mxu0
      %v1402 = vadd.f32 %v1304, %v1401
      %v1403 = vpop.f32.mrf.mxu0
      %1404 = vmatprep.mubr.f32.mxu0 0.0
      %1405 = vmatmul.mubr.f32.gmra.mxu0 %v1276
      %v1406 = vpop.f32.mrf.mxu0
      %v1407 = vadd.f32 %v1304, %v1406
      %v1408 = vpop.f32.mrf.mxu0
      %1409 = vmatprep.mubr.f32.mxu0 0.0
      %1410 = vmatmul.mubr.f32.gmra.mxu0 %v1277
      %v1411 = vpop.f32.mrf.mxu0
      %v1412 = vadd.f32 %v1304, %v1411
      %v1413 = vpop.f32.mrf.mxu0
      %1414 = vmatprep.mubr.f32.mxu0 0.0
      %1415 = vmatmul.mubr.f32.gmra.mxu0 %v1278
      %v1416 = vpop.f32.mrf.mxu0
      %v1417 = vadd.f32 %v1304, %v1416
      %v1418 = vpop.f32.mrf.mxu0
      %1419 = vmatprep.mubr.f32.mxu0 0.0
      %1420 = vmatmul.mubr.f32.gmra.mxu0 %v1279
      %v1421 = vpop.f32.mrf.mxu0
      %v1422 = vadd.f32 %v1304, %v1421
      %v1423 = vpop.f32.mrf.mxu0
      %1424 = vmatprep.mubr.f32.mxu0 0.0
      %1425 = vmatmul.mubr.f32.gmra.mxu0 %v1280
      %v1426 = vpop.f32.mrf.mxu0
      %v1427 = vadd.f32 %v1304, %v1426
      %v1428 = vpop.f32.mrf.mxu0
      %1429 = vmatprep.mubr.f32.mxu0 0.0
      %1430 = vmatmul.mubr.f32.gmra.mxu0 %v1281
      %v1431 = vpop.f32.mrf.mxu0
      %v1432 = vadd.f32 %v1304, %v1431
      %v1433 = vpop.f32.mrf.mxu0
      %1434 = vmatprep.mubr.f32.mxu0 0.0
      %1435 = vmatmul.mubr.f32.gmra.mxu0 %v1282
      %v1436 = vpop.f32.mrf.mxu0
      %v1437 = vadd.f32 %v1304, %v1436
      %v1438 = vpop.f32.mrf.mxu0
      %1439 = vmatprep.mubr.f32.mxu0 0.0
      %1440 = vmatmul.mubr.f32.gmra.mxu0 %v1283
      %v1441 = vpop.f32.mrf.mxu0
      %v1442 = vadd.f32 %v1304, %v1441
      %v1443 = vpop.f32.mrf.mxu0
      %1444 = vmatprep.mubr.f32.mxu0 0.0
      %1445 = vmatmul.mubr.f32.gmra.mxu0 %v1284
      %v1446 = vpop.f32.mrf.mxu0
      %v1447 = vadd.f32 %v1304, %v1446
      %v1448 = vpop.f32.mrf.mxu0
      %1449 = vdwg.mxu0
      %v1450 = vmul.f32 %v277, 1.442695
      %v1451 = vpow.pop %v1450
      %v1452 = vld [vmem:[%s269] sm:$0xff]
      %v1453 = vld [vmem:[%s269 + $0x8] sm:$0xff]
      %v1454 = vld [vmem:[%s269 + $0x10] sm:$0xff]
      %v1455 = vld [vmem:[%s269 + $0x18] sm:$0xff]
      %v1456 = vld [vmem:[%s269 + $0x20] sm:$0xff]
      %v1457 = vld [vmem:[%s269 + $0x28] sm:$0xff]
      %v1458 = vld [vmem:[%s269 + $0x30] sm:$0xff]
      %v1459 = vld [vmem:[%s269 + $0x38] sm:$0xff]
      %v1460 = vld [vmem:[%s269 + $0x40] sm:$0xff]
      %v1461 = vld [vmem:[%s269 + $0x48] sm:$0xff]
      %v1462 = vld [vmem:[%s269 + $0x50] sm:$0xff]
      %v1463 = vld [vmem:[%s269 + $0x58] sm:$0xff]
      %v1464 = vld [vmem:[%s269 + $0x60] sm:$0xff]
      %v1465 = vld [vmem:[%s269 + $0x68] sm:$0xff]
      %v1466 = vld [vmem:[%s269 + $0x70] sm:$0xff]
      %v1467 = vld [vmem:[%s269 + $0x78] sm:$0xff]
      %v1468 = vlaneseq
      %v1469 = vshrl.u32 %v1468, 7
      %v1470 = vsub.s32 7, %v1469
      %v1471 = vrot.slane %v1451, %v1470
      %v1472 = vmul.f32 %v1471, %v1452
      %v1473 = vmul.f32 %v1471, %v1453
      %v1474 = vmul.f32 %v1471, %v1454
      %v1475 = vmul.f32 %v1471, %v1455
      %v1476 = vmul.f32 %v1471, %v1456
      %v1477 = vmul.f32 %v1471, %v1457
      %v1478 = vmul.f32 %v1471, %v1458
      %v1479 = vmul.f32 %v1471, %v1459
      %v1480 = vmul.f32 %v1471, %v1460
      %v1481 = vmul.f32 %v1471, %v1461
      %v1482 = vmul.f32 %v1471, %v1462
      %v1483 = vmul.f32 %v1471, %v1463
      %v1484 = vmul.f32 %v1471, %v1464
      %v1485 = vmul.f32 %v1471, %v1465
      %v1486 = vmul.f32 %v1471, %v1466
      %v1487 = vmul.f32 %v1471, %v1467
      %v1488 = vadd.f32 %v1372, %v1472
      %v1489 = vadd.f32 %v1377, %v1473
      %v1490 = vadd.f32 %v1382, %v1474
      %v1491 = vadd.f32 %v1387, %v1475
      %v1492 = vadd.f32 %v1392, %v1476
      %v1493 = vadd.f32 %v1397, %v1477
      %v1494 = vadd.f32 %v1402, %v1478
      %v1495 = vadd.f32 %v1407, %v1479
      %v1496 = vadd.f32 %v1412, %v1480
      %v1497 = vadd.f32 %v1417, %v1481
      %v1498 = vadd.f32 %v1422, %v1482
      %v1499 = vadd.f32 %v1427, %v1483
      %v1500 = vadd.f32 %v1432, %v1484
      %v1501 = vadd.f32 %v1437, %v1485
      %v1502 = vadd.f32 %v1442, %v1486
      %v1503 = vadd.f32 %v1447, %v1487
      %1504 = vst [vmem:[%s275] sm:$0xff] %v1488
      %1505 = vst [vmem:[%s275 + $0x8] sm:$0xff] %v1489
      %1506 = vst [vmem:[%s275 + $0x10] sm:$0xff] %v1490
      %1507 = vst [vmem:[%s275 + $0x18] sm:$0xff] %v1491
      %1508 = vst [vmem:[%s275 + $0x20] sm:$0xff] %v1492
      %1509 = vst [vmem:[%s275 + $0x28] sm:$0xff] %v1493
      %1510 = vst [vmem:[%s275 + $0x30] sm:$0xff] %v1494
      %1511 = vst [vmem:[%s275 + $0x38] sm:$0xff] %v1495
      %1512 = vst [vmem:[%s275 + $0x40] sm:$0xff] %v1496
      %1513 = vst [vmem:[%s275 + $0x48] sm:$0xff] %v1497
      %1514 = vst [vmem:[%s275 + $0x50] sm:$0xff] %v1498
      %1515 = vst [vmem:[%s275 + $0x58] sm:$0xff] %v1499
      %1516 = vst [vmem:[%s275 + $0x60] sm:$0xff] %v1500
      %1517 = vst [vmem:[%s275 + $0x68] sm:$0xff] %v1501
      %1518 = vst [vmem:[%s275 + $0x70] sm:$0xff] %v1502
      %1519 = vst [vmem:[%s275 + $0x78] sm:$0xff] %v1503
      %s1520 = smul.u32 16, %s17
      %p1521 = scmp.lt.s32.totalorder %s1520, 31
      %s1522 = scalar_select %p1521, %s1520, 31
      %s1523 = smul.addr %s1522, 8
      %s1524 = scalar_lea.vmem %s6, %s1523
      // Predicated region
      $region45: #{fwd.1} parent=43 // pred_check
        %p1525 = pneg %p171
      $region46: #{fwd.1} parent=43 // pred_check_branch
        %1527 = sbr.rel (%p1525) target = $region48
      $region47: #{fwd.1} parent=43 // pred_region
        %s1528 = smul.u32 16, %s17
      $region48: #{fwd.1} parent=43 // pred_fallthru
        _
    $region44: #{fwd.1} parent=5 // pred_fallthru
      _
    %p1529 = scmp.le.s32.totalorder 2, %s12
    // Predicated region
    $region49: #{fwd.1} parent=5 // pred_check
      %p1530 = pneg %p1529
    $region50: #{fwd.1} parent=5 // pred_check_branch
      %1532 = sbr.rel (%p1530) target = $region52
    $region51: #{fwd.1} parent=5 // pred_region
      %s1533 = ssub.s32 %s12, 2
      // Predicated region
      $region53: #{fwd.1} parent=51 // pred_check
        %p1534 = pneg %p177
      $region54: #{fwd.1} parent=51 // pred_check_branch
        %1536 = sbr.rel (%p1534) target = $region56
      $region55: #{fwd.1} parent=51 // pred_region
        %s1537 = smul.u32 16, %s18
        %p1538 = scmp.lt.s32.totalorder %s1537, 31
        %s1539 = scalar_select %p1538, %s1537, 31
        %s1540 = smul.addr %s1539, 8
        %s1541 = scalar_lea.vmem %s6, %s1540
      $region56: #{fwd.1} parent=51 // pred_fallthru
        _
    $region52: #{fwd.1} parent=5 // pred_fallthru
      _
  $region6: #{fwd.1} parent=0 // loop_footer
    %s16 = sadd.s32 1, %s12
  $region7: #{fwd.1} parent=0 // loop_footer_branch
    %11 = sbr.rel target = $region3
  $region8: #{fwd.1} parent=0 // loop_exit
    _

</llo_original>
